<compile_context>
chip_gen: v7x
topology: tpu7x:2x2x1
jax: 0.10.0
libtpu: 0.0.40
codegen_flags: <defaults>
</compile_context>

<pallas_src>
import functools

import numpy as np
import jax
import jax.numpy as jnp
from jax.experimental import pallas as pl
from jax.experimental.pallas import tpu as pltpu

LANE = 128     # lane-dense feature width (== W1*C1 == W2*C2)
C1 = 16        # conv1 channels
C2 = 32        # conv2 channels
ENC = 32       # width of each of pose / goal / obj-pose encoders (3*ENC <= LANE)
HEAD = 64      # fusion head width
ACT = 6        # 6-dof action (pose0 xyz + pose1 xyz)
K = 3          # conv kernel
STRIDE = 2
PAD = 1


def _conv_out(n):
    return (n + 2 * PAD - K) // STRIDE + 1


# ------------------------------ fused Pallas kernel ------------------------------

def _fused_kernel(ximg_ref, rs1_ref, w1_ref, rs2_ref, w2_ref, pools_ref,
                  poses_ref, goal_ref, fop_ref, w_pose_ref, w_goal_ref, w_objp_ref,
                  w_fc1_ref, w_fc2_ref, biases_ref, action_ref, loss_ref, *, n_act):
    f32, bf16 = jnp.float32, jnp.bfloat16
    x = ximg_ref[...]                                             # (Bt*Hp, 128) bf16

    # conv1 (3x3 / stride 2 / pad 1): H-taps via tiny constant row-gather matmuls, the
    # W-taps + stride are folded into the block-structured weight; the 3 gathered taps are
    # lane-packed so conv1 is one 384-deep-contraction MXU dot.
    g1 = [jnp.dot(rs1_ref[k], x, preferred_element_type=f32).astype(bf16)
          for k in range(K)]
    y1 = jnp.dot(jnp.concatenate(g1, axis=-1), w1_ref[...], preferred_element_type=f32)
    y1 = jnp.maximum(y1 + biases_ref[0], 0.0).astype(bf16)        # (Bt*H1, W1*C1=128)

    # conv2: same trick on the lane-dense conv1 activations.  Boundary positions are zero
    # via all-zero selection rows / absent weight blocks (== the conv's zero padding).
    g2 = [jnp.dot(rs2_ref[k], y1, preferred_element_type=f32).astype(bf16)
          for k in range(K)]
    y2 = jnp.dot(jnp.concatenate(g2, axis=-1), w2_ref[...], preferred_element_type=f32)
    y2 = jnp.maximum(y2 + biases_ref[1], 0.0).astype(bf16)        # (Bt*H2, W2*C2=128)

    # Global mean pools: one bf16 matmul over rows (scene-image per-sample pool + shared
    # filtered-object pool); the sum over the W2 lane blocks is folded into the tiled fc1
    # weights below, completing the spatial mean.
    pooled = jnp.dot(pools_ref[...], y2, preferred_element_type=f32)   # (2B, 128)
    nb = pooled.shape[0] // 2
    img_feat = pooled[:nb].astype(bf16)
    obj_feat = pooled[nb:].astype(bf16)

    # pose / goal / filtered-object-pose encoders: split-accumulated matmuls writing into
    # disjoint lane blocks (replaces the wrapper-side concat/pad of the previous version).
    obj_poses = jnp.broadcast_to(fop_ref[...], (nb, fop_ref.shape[1]))
    aux = (jnp.dot(poses_ref[...].astype(bf16), w_pose_ref[...], preferred_element_type=f32)
           + jnp.dot(goal_ref[...].astype(bf16), w_goal_ref[...], preferred_element_type=f32)
           + jnp.dot(obj_poses.astype(bf16), w_objp_ref[...], preferred_element_type=f32))
    aux_feat = jnp.maximum(aux + biases_ref[2], 0.0).astype(bf16)      # (B, 128)

    # Fusion fc1: split-accumulated matmuls replace concat([img, obj, aux]) @ W_fc1.
    h = (jnp.dot(img_feat, w_fc1_ref[0], preferred_element_type=f32)
         + jnp.dot(obj_feat, w_fc1_ref[1], preferred_element_type=f32)
         + jnp.dot(aux_feat, w_fc1_ref[2], preferred_element_type=f32)
         + biases_ref[3])
    h = jnp.maximum(h, 0.0).astype(bf16)

    # fc2 -> (B, 128) prediction; real block is lanes [0, ACT).
    pred = jnp.dot(h, w_fc2_ref[...], preferred_element_type=f32) + biases_ref[4]

    # Behaviour-cloning MSE vs the target action; scalar result goes to SMEM.
    diff = pred[:, :n_act] - action_ref[...]
    loss_ref[0, 0] = jnp.sum(diff * diff) * (1.0 / float(nb * n_act))


# ------------------------------ parameters / constants ------------------------------

def init_params(key, *, in_ch, n_poses, goal_dim, n_filt_obj, B, H, W):
    H1, W1 = _conv_out(H), _conv_out(W)
    H2, W2 = _conv_out(H1), _conv_out(W1)
    Hp, Wp = H + 2 * PAD, W + 2 * PAD
    Bt = B + n_filt_obj
    aux_d = n_poses * 3 + goal_dim + n_filt_obj * 3
    assert W1 * C1 == LANE and W2 * C2 == LANE, "lane-dense layout assumes W1*C1 == W2*C2 == 128"
    assert Wp * in_ch <= LANE and aux_d <= LANE and 3 * ENC <= LANE and HEAD <= LANE

    ks = jax.random.split(key, 9)
    s = 0.1

    def rnd(k, shape):
        return s * np.asarray(jax.random.normal(k, shape, jnp.float32))

    conv1_w = rnd(ks[0], (K, K, in_ch, C1))
    conv2_w = rnd(ks[1], (K, K, C1, C2))
    w_pose_core = rnd(ks[2], (n_poses * 3, ENC))
    w_goal_core = rnd(ks[3], (goal_dim, ENC))
    w_objp_core = rnd(ks[4], (n_filt_obj * 3, ENC))
    fc1_img = rnd(ks[5], (C2, HEAD))
    fc1_obj = rnd(ks[6], (C2, HEAD))
    fc1_aux = rnd(ks[7], (3 * ENC, HEAD))
    fc2_core = rnd(ks[8], (HEAD, ACT))

    # conv1 folded weight: contraction lanes = (ki, padded w, ci) -> output lanes = (ow1, co).
    w1f = np.zeros((K * LANE, LANE), np.float32)
    for ki in range(K):
        for ow in range(W1):
            for kj in range(K):
                w = STRIDE * ow + kj                       # padded input column, always valid
                r0 = ki * LANE + w * in_ch
                w1f[r0:r0 + in_ch, ow * C1:(ow + 1) * C1] = conv1_w[ki, kj]

    # conv2 folded weight: contraction lanes = (ki, w1, c1) -> output lanes = (ow2, c2);
    # out-of-range input columns (zero padding) simply have no weight rows.
    w2f = np.zeros((K * LANE, LANE), np.float32)
    for ki in range(K):
        for ow in range(W2):
            for kj in range(K):
                w1 = STRIDE * ow + kj - PAD
                if 0 <= w1 < W1:
                    r0 = ki * LANE + w1 * C1
                    w2f[r0:r0 + C1, ow * C2:(ow + 1) * C2] = conv2_w[ki, kj]

    # Tiny constant 0/1 row-gather matrices (H-taps incl. stride-2; all-zero rows == zero pad).
    rs1 = np.zeros((K, Bt * H1, Bt * Hp), np.float32)
    for ki in range(K):
        for b in range(Bt):
            for oh in range(H1):
                rs1[ki, b * H1 + oh, b * Hp + STRIDE * oh + ki] = 1.0
    rs2 = np.zeros((K, Bt * H2, Bt * H1), np.float32)
    for ki in range(K):
        for b in range(Bt):
            for oh in range(H2):
                r = STRIDE * oh + ki - PAD
                if 0 <= r < H1:
                    rs2[ki, b * H2 + oh, b * H1 + r] = 1.0

    # Mean-pool row weights (bf16; 1/48 rounds to bf16, fine for a BC loss).
    sp = H2 * W2
    pools = np.zeros((2 * B, Bt * H2), np.float32)
    for b in range(B):
        pools[b, b * H2:(b + 1) * H2] = 1.0 / sp                       # scene image mean
        pools[B + b, B * H2:Bt * H2] = 1.0 / (n_filt_obj * sp)         # shared object mean

    # Encoders write disjoint lane blocks [0,32) / [32,64) / [64,96).
    w_pose = np.zeros((n_poses * 3, LANE), np.float32); w_pose[:, 0:ENC] = w_pose_core
    w_goal = np.zeros((goal_dim, LANE), np.float32);    w_goal[:, ENC:2 * ENC] = w_goal_core
    w_objp = np.zeros((n_filt_obj * 3, LANE), np.float32); w_objp[:, 2 * ENC:3 * ENC] = w_objp_core

    # fc1: img/obj branches tiled over the W2 lane blocks (the tiling performs the sum over
    # ow2 that completes the spatial mean); aux branch acts on lanes [0, 96).
    w_fc1 = np.zeros((3, LANE, LANE), np.float32)
    for ow in range(W2):
        w_fc1[0, ow * C2:(ow + 1) * C2, :HEAD] = fc1_img
        w_fc1[1, ow * C2:(ow + 1) * C2, :HEAD] = fc1_obj
    w_fc1[2, :3 * ENC, :HEAD] = fc1_aux

    w_fc2 = np.zeros((LANE, LANE), np.float32)
    w_fc2[:HEAD, :ACT] = fc2_core

    bf = jnp.bfloat16
    return {
        "rs1": jnp.asarray(rs1, bf), "w1f": jnp.asarray(w1f, bf),
        "rs2": jnp.asarray(rs2, bf), "w2f": jnp.asarray(w2f, bf),
        "pools": jnp.asarray(pools, bf),
        "w_pose": jnp.asarray(w_pose, bf), "w_goal": jnp.asarray(w_goal, bf),
        "w_objp": jnp.asarray(w_objp, bf),
        "w_fc1": jnp.asarray(w_fc1, bf), "w_fc2": jnp.asarray(w_fc2, bf),
        # biases (all zero-init): [0]=conv1, [1]=conv2, [2]=aux encoders, [3]=fc1, [4]=fc2
        "biases": jnp.zeros((5, 1, LANE), jnp.float32),
    }


# ------------------------------ JAX-side packing + forward ------------------------------

def abil_dt_forward(params, images, poses, action, goal, filt_obj_images, filt_obj_poses):
    """ABIL_DTModel.forward == policy.dt(...): BC (MSE) loss via one fused Pallas kernel."""
    B = images.shape[0]

    # Pack scene + filtered-object images once: NCHW -> NHWC, zero-pad spatially (conv pad=1),
    # flatten to rows=(b, padded h), lanes=(padded w, c), lane-pad to 128.  ~23 KiB; the 9x
    # im2col expansion of the previous version is gone (conv taps are built in-kernel).
    all_imgs = jnp.concatenate([images, filt_obj_images], axis=0).astype(jnp.float32)
    x = jnp.transpose(all_imgs, (0, 2, 3, 1))
    x = jnp.pad(x, ((0, 0), (PAD, PAD), (PAD, PAD), (0, 0)))
    Bt, Hp, Wp, C = x.shape
    ximg = jnp.pad(x.reshape(Bt * Hp, Wp * C),
                   ((0, 0), (0, LANE - Wp * C))).astype(jnp.bfloat16)

    poses2d = poses.reshape(B, -1).astype(jnp.float32)
    goal2d = goal.astype(jnp.float32)
    fop = filt_obj_poses.reshape(1, -1).astype(jnp.float32)
    action2d = action.astype(jnp.float32)

    args = (ximg, params["rs1"], params["w1f"], params["rs2"], params["w2f"], params["pools"],
            poses2d, goal2d, fop, params["w_pose"], params["w_goal"], params["w_objp"],
            params["w_fc1"], params["w_fc2"], params["biases"], action2d)

    m1, m2 = params["rs1"].shape[1], params["rs2"].shape[1]
    flops = 2 * (K * m1 * params["rs1"].shape[2] * LANE + m1 * (K * LANE) * LANE
                 + K * m2 * params["rs2"].shape[2] * LANE + m2 * (K * LANE) * LANE
                 + params["pools"].shape[0] * m2 * LANE
                 + B * (poses2d.shape[1] + goal2d.shape[1] + fop.shape[1]) * LANE
                 + 4 * B * LANE * LANE)
    bytes_accessed = sum(int(np.prod(a.shape)) * a.dtype.itemsize for a in args) + 4

    loss = pl.pallas_call(
        functools.partial(_fused_kernel, n_act=ACT),
        out_shape=jax.ShapeDtypeStruct((1, 1), jnp.float32),
        in_specs=[pl.BlockSpec(a.shape) for a in args],               # whole arrays VMEM-resident
        out_specs=pl.BlockSpec(memory_space=pltpu.MemorySpace.SMEM),  # scalar loss -> SMEM
        cost_estimate=pl.CostEstimate(flops=int(flops), transcendentals=0,
                                      bytes_accessed=int(bytes_accessed)),
    )(*args)
    return loss[0, 0]


# --------------------------------------- main ---------------------------------------

if __name__ == "__main__":
    B, C, H, W = 2, 4, 16, 16           # scene images (NCHW, as PyTorch)
    P = 8                               # candidate poses per scene
    G = 8                               # goal / predicate vector dim
    NF = 3                              # filtered object crops (items + containers)

    key = jax.random.PRNGKey(0)
    k_img, k_pose, k_act, k_goal, k_fimg, k_fpose = jax.random.split(key, 6)
    images = jax.random.normal(k_img, (B, C, H, W), jnp.float32)
    poses = jax.random.normal(k_pose, (B, P, 3), jnp.float32)
    action = jax.random.normal(k_act, (B, ACT), jnp.float32)
    goal = jax.random.normal(k_goal, (B, G), jnp.float32)
    filt_obj_images = jax.random.normal(k_fimg, (NF, C, H, W), jnp.float32)
    filt_obj_poses = jax.random.normal(k_fpose, (NF, 3), jnp.float32)

    params = init_params(jax.random.PRNGKey(42), in_ch=C, n_poses=P, goal_dim=G,
                         n_filt_obj=NF, B=B, H=H, W=W)

    fwd = jax.jit(abil_dt_forward)
    loss = fwd(params, images, poses, action, goal, filt_obj_images, filt_obj_poses)
    jax.block_until_ready(loss)
    assert loss.shape == () and bool(jnp.isfinite(loss))
    print("KERNEL_OK")
</pallas_src>

<mosaic_0001>
module attributes {stable_mosaic.version = 11 : i64} {
  func.func @_fused_kernel(%arg0: memref<90x128xbf16, #tpu.memory_space<vmem>>, %arg1: memref<3x40x90xbf16, #tpu.memory_space<vmem>>, %arg2: memref<384x128xbf16, #tpu.memory_space<vmem>>, %arg3: memref<3x20x40xbf16, #tpu.memory_space<vmem>>, %arg4: memref<384x128xbf16, #tpu.memory_space<vmem>>, %arg5: memref<4x20xbf16, #tpu.memory_space<vmem>>, %arg6: memref<2x24xf32, #tpu.memory_space<vmem>>, %arg7: memref<2x8xf32, #tpu.memory_space<vmem>>, %arg8: memref<1x9xf32, #tpu.memory_space<vmem>>, %arg9: memref<24x128xbf16, #tpu.memory_space<vmem>>, %arg10: memref<8x128xbf16, #tpu.memory_space<vmem>>, %arg11: memref<9x128xbf16, #tpu.memory_space<vmem>>, %arg12: memref<3x128x128xbf16, #tpu.memory_space<vmem>>, %arg13: memref<128x128xbf16, #tpu.memory_space<vmem>>, %arg14: memref<5x1x128xf32, #tpu.memory_space<vmem>>, %arg15: memref<2x6xf32, #tpu.memory_space<vmem>>, %arg16: memref<1x1xf32, #tpu.memory_space<smem>>) attributes {dimension_semantics = [], scalar_prefetch = 0 : i64, scratch_operands = 0 : i64, tpu.core_type = #tpu.core_type<tc>} {
    %c0 = arith.constant 0 : index
    %c0_0 = arith.constant 0 : index
    %0 = vector.load %arg0[%c0, %c0_0] : memref<90x128xbf16, #tpu.memory_space<vmem>>, vector<90x128xbf16>
    %c0_1 = arith.constant 0 : index
    %c0_2 = arith.constant 0 : index
    %c0_3 = arith.constant 0 : index
    %1 = vector.load %arg1[%c0_1, %c0_2, %c0_3] : memref<3x40x90xbf16, #tpu.memory_space<vmem>>, vector<1x40x90xbf16>
    %2 = vector.shape_cast %1 : vector<1x40x90xbf16> to vector<40x90xbf16>
    %cst = arith.constant dense<0.000000e+00> : vector<40x128xf32>
    %3 = tpu.matmul %2, %0, %cst {dimension_numbers = #tpu.dot_dimension_numbers<[1], [0], [0], [1], [0, 0, 1, 1], [], []>} : vector<40x90xbf16>, vector<90x128xbf16>, vector<40x128xf32> -> vector<40x128xf32>
    %4 = arith.truncf %3 : vector<40x128xf32> to vector<40x128xbf16>
    %c1 = arith.constant 1 : index
    %c0_4 = arith.constant 0 : index
    %c0_5 = arith.constant 0 : index
    %5 = vector.load %arg1[%c1, %c0_4, %c0_5] : memref<3x40x90xbf16, #tpu.memory_space<vmem>>, vector<1x40x90xbf16>
    %6 = vector.shape_cast %5 : vector<1x40x90xbf16> to vector<40x90xbf16>
    %cst_6 = arith.constant dense<0.000000e+00> : vector<40x128xf32>
    %7 = tpu.matmul %6, %0, %cst_6 {dimension_numbers = #tpu.dot_dimension_numbers<[1], [0], [0], [1], [0, 0, 1, 1], [], []>} : vector<40x90xbf16>, vector<90x128xbf16>, vector<40x128xf32> -> vector<40x128xf32>
    %8 = arith.truncf %7 : vector<40x128xf32> to vector<40x128xbf16>
    %c2 = arith.constant 2 : index
    %c0_7 = arith.constant 0 : index
    %c0_8 = arith.constant 0 : index
    %9 = vector.load %arg1[%c2, %c0_7, %c0_8] : memref<3x40x90xbf16, #tpu.memory_space<vmem>>, vector<1x40x90xbf16>
    %10 = vector.shape_cast %9 : vector<1x40x90xbf16> to vector<40x90xbf16>
    %cst_9 = arith.constant dense<0.000000e+00> : vector<40x128xf32>
    %11 = tpu.matmul %10, %0, %cst_9 {dimension_numbers = #tpu.dot_dimension_numbers<[1], [0], [0], [1], [0, 0, 1, 1], [], []>} : vector<40x90xbf16>, vector<90x128xbf16>, vector<40x128xf32> -> vector<40x128xf32>
    %12 = arith.truncf %11 : vector<40x128xf32> to vector<40x128xbf16>
    %13 = tpu.concatenate %4, %8, %12 in 1 : vector<40x128xbf16>, vector<40x128xbf16>, vector<40x128xbf16> -> vector<40x384xbf16>
    %c0_10 = arith.constant 0 : index
    %c0_11 = arith.constant 0 : index
    %14 = vector.load %arg2[%c0_10, %c0_11] : memref<384x128xbf16, #tpu.memory_space<vmem>>, vector<384x128xbf16>
    %cst_12 = arith.constant dense<0.000000e+00> : vector<40x128xf32>
    %15 = tpu.matmul %13, %14, %cst_12 {dimension_numbers = #tpu.dot_dimension_numbers<[1], [0], [0], [1], [0, 0, 1, 1], [], []>} : vector<40x384xbf16>, vector<384x128xbf16>, vector<40x128xf32> -> vector<40x128xf32>
    %c0_13 = arith.constant 0 : index
    %c0_14 = arith.constant 0 : index
    %c0_15 = arith.constant 0 : index
    %16 = vector.load %arg14[%c0_13, %c0_14, %c0_15] : memref<5x1x128xf32, #tpu.memory_space<vmem>>, vector<1x1x128xf32>
    %17 = vector.shape_cast %16 : vector<1x1x128xf32> to vector<1x128xf32>
    %18 = vector.broadcast %17 : vector<1x128xf32> to vector<40x128xf32>
    %19 = arith.addf %15, %18 : vector<40x128xf32>
    %cst_16 = arith.constant 0.000000e+00 : f32
    %20 = vector.broadcast %cst_16 : f32 to vector<40x128xf32>
    %21 = arith.maximumf %19, %20 : vector<40x128xf32>
    %22 = arith.truncf %21 : vector<40x128xf32> to vector<40x128xbf16>
    %c0_17 = arith.constant 0 : index
    %c0_18 = arith.constant 0 : index
    %c0_19 = arith.constant 0 : index
    %23 = vector.load %arg3[%c0_17, %c0_18, %c0_19] : memref<3x20x40xbf16, #tpu.memory_space<vmem>>, vector<1x20x40xbf16>
    %24 = vector.shape_cast %23 : vector<1x20x40xbf16> to vector<20x40xbf16>
    %cst_20 = arith.constant dense<0.000000e+00> : vector<20x128xf32>
    %25 = tpu.matmul %24, %22, %cst_20 {dimension_numbers = #tpu.dot_dimension_numbers<[1], [0], [0], [1], [0, 0, 1, 1], [], []>} : vector<20x40xbf16>, vector<40x128xbf16>, vector<20x128xf32> -> vector<20x128xf32>
    %26 = arith.truncf %25 : vector<20x128xf32> to vector<20x128xbf16>
    %c1_21 = arith.constant 1 : index
    %c0_22 = arith.constant 0 : index
    %c0_23 = arith.constant 0 : index
    %27 = vector.load %arg3[%c1_21, %c0_22, %c0_23] : memref<3x20x40xbf16, #tpu.memory_space<vmem>>, vector<1x20x40xbf16>
    %28 = vector.shape_cast %27 : vector<1x20x40xbf16> to vector<20x40xbf16>
    %cst_24 = arith.constant dense<0.000000e+00> : vector<20x128xf32>
    %29 = tpu.matmul %28, %22, %cst_24 {dimension_numbers = #tpu.dot_dimension_numbers<[1], [0], [0], [1], [0, 0, 1, 1], [], []>} : vector<20x40xbf16>, vector<40x128xbf16>, vector<20x128xf32> -> vector<20x128xf32>
    %30 = arith.truncf %29 : vector<20x128xf32> to vector<20x128xbf16>
    %c2_25 = arith.constant 2 : index
    %c0_26 = arith.constant 0 : index
    %c0_27 = arith.constant 0 : index
    %31 = vector.load %arg3[%c2_25, %c0_26, %c0_27] : memref<3x20x40xbf16, #tpu.memory_space<vmem>>, vector<1x20x40xbf16>
    %32 = vector.shape_cast %31 : vector<1x20x40xbf16> to vector<20x40xbf16>
    %cst_28 = arith.constant dense<0.000000e+00> : vector<20x128xf32>
    %33 = tpu.matmul %32, %22, %cst_28 {dimension_numbers = #tpu.dot_dimension_numbers<[1], [0], [0], [1], [0, 0, 1, 1], [], []>} : vector<20x40xbf16>, vector<40x128xbf16>, vector<20x128xf32> -> vector<20x128xf32>
    %34 = arith.truncf %33 : vector<20x128xf32> to vector<20x128xbf16>
    %35 = tpu.concatenate %26, %30, %34 in 1 : vector<20x128xbf16>, vector<20x128xbf16>, vector<20x128xbf16> -> vector<20x384xbf16>
    %c0_29 = arith.constant 0 : index
    %c0_30 = arith.constant 0 : index
    %36 = vector.load %arg4[%c0_29, %c0_30] : memref<384x128xbf16, #tpu.memory_space<vmem>>, vector<384x128xbf16>
    %cst_31 = arith.constant dense<0.000000e+00> : vector<20x128xf32>
    %37 = tpu.matmul %35, %36, %cst_31 {dimension_numbers = #tpu.dot_dimension_numbers<[1], [0], [0], [1], [0, 0, 1, 1], [], []>} : vector<20x384xbf16>, vector<384x128xbf16>, vector<20x128xf32> -> vector<20x128xf32>
    %c1_32 = arith.constant 1 : index
    %c0_33 = arith.constant 0 : index
    %c0_34 = arith.constant 0 : index
    %38 = vector.load %arg14[%c1_32, %c0_33, %c0_34] : memref<5x1x128xf32, #tpu.memory_space<vmem>>, vector<1x1x128xf32>
    %39 = vector.shape_cast %38 : vector<1x1x128xf32> to vector<1x128xf32>
    %40 = vector.broadcast %39 : vector<1x128xf32> to vector<20x128xf32>
    %41 = arith.addf %37, %40 : vector<20x128xf32>
    %cst_35 = arith.constant 0.000000e+00 : f32
    %42 = vector.broadcast %cst_35 : f32 to vector<20x128xf32>
    %43 = arith.maximumf %41, %42 : vector<20x128xf32>
    %44 = arith.truncf %43 : vector<20x128xf32> to vector<20x128xbf16>
    %c0_36 = arith.constant 0 : index
    %c0_37 = arith.constant 0 : index
    %45 = vector.load %arg5[%c0_36, %c0_37] : memref<4x20xbf16, #tpu.memory_space<vmem>>, vector<4x20xbf16>
    %cst_38 = arith.constant dense<0.000000e+00> : vector<4x128xf32>
    %46 = tpu.matmul %45, %44, %cst_38 {dimension_numbers = #tpu.dot_dimension_numbers<[1], [0], [0], [1], [0, 0, 1, 1], [], []>} : vector<4x20xbf16>, vector<20x128xbf16>, vector<4x128xf32> -> vector<4x128xf32>
    %47 = vector.extract_strided_slice %46 {offsets = [0, 0], sizes = [2, 128], strides = [1, 1]} : vector<4x128xf32> to vector<2x128xf32>
    %48 = arith.truncf %47 : vector<2x128xf32> to vector<2x128xbf16>
    %49 = vector.extract_strided_slice %46 {offsets = [2, 0], sizes = [2, 128], strides = [1, 1]} : vector<4x128xf32> to vector<2x128xf32>
    %50 = arith.truncf %49 : vector<2x128xf32> to vector<2x128xbf16>
    %c0_39 = arith.constant 0 : index
    %c0_40 = arith.constant 0 : index
    %51 = vector.load %arg8[%c0_39, %c0_40] : memref<1x9xf32, #tpu.memory_space<vmem>>, vector<1x9xf32>
    %52 = vector.shape_cast %51 : vector<1x9xf32> to vector<1x9xf32>
    %53 = vector.broadcast %52 : vector<1x9xf32> to vector<2x9xf32>
    %c0_41 = arith.constant 0 : index
    %c0_42 = arith.constant 0 : index
    %54 = vector.load %arg6[%c0_41, %c0_42] : memref<2x24xf32, #tpu.memory_space<vmem>>, vector<2x24xf32>
    %55 = arith.truncf %54 : vector<2x24xf32> to vector<2x24xbf16>
    %c0_43 = arith.constant 0 : index
    %c0_44 = arith.constant 0 : index
    %56 = vector.load %arg9[%c0_43, %c0_44] : memref<24x128xbf16, #tpu.memory_space<vmem>>, vector<24x128xbf16>
    %cst_45 = arith.constant dense<0.000000e+00> : vector<2x128xf32>
    %57 = tpu.matmul %55, %56, %cst_45 {dimension_numbers = #tpu.dot_dimension_numbers<[1], [0], [0], [1], [0, 0, 1, 1], [], []>} : vector<2x24xbf16>, vector<24x128xbf16>, vector<2x128xf32> -> vector<2x128xf32>
    %c0_46 = arith.constant 0 : index
    %c0_47 = arith.constant 0 : index
    %58 = vector.load %arg7[%c0_46, %c0_47] : memref<2x8xf32, #tpu.memory_space<vmem>>, vector<2x8xf32>
    %59 = arith.truncf %58 : vector<2x8xf32> to vector<2x8xbf16>
    %c0_48 = arith.constant 0 : index
    %c0_49 = arith.constant 0 : index
    %60 = vector.load %arg10[%c0_48, %c0_49] : memref<8x128xbf16, #tpu.memory_space<vmem>>, vector<8x128xbf16>
    %cst_50 = arith.constant dense<0.000000e+00> : vector<2x128xf32>
    %61 = tpu.matmul %59, %60, %cst_50 {dimension_numbers = #tpu.dot_dimension_numbers<[1], [0], [0], [1], [0, 0, 1, 1], [], []>} : vector<2x8xbf16>, vector<8x128xbf16>, vector<2x128xf32> -> vector<2x128xf32>
    %62 = arith.addf %57, %61 : vector<2x128xf32>
    %63 = arith.truncf %53 : vector<2x9xf32> to vector<2x9xbf16>
    %c0_51 = arith.constant 0 : index
    %c0_52 = arith.constant 0 : index
    %64 = vector.load %arg11[%c0_51, %c0_52] : memref<9x128xbf16, #tpu.memory_space<vmem>>, vector<9x128xbf16>
    %cst_53 = arith.constant dense<0.000000e+00> : vector<2x128xf32>
    %65 = tpu.matmul %63, %64, %cst_53 {dimension_numbers = #tpu.dot_dimension_numbers<[1], [0], [0], [1], [0, 0, 1, 1], [], []>} : vector<2x9xbf16>, vector<9x128xbf16>, vector<2x128xf32> -> vector<2x128xf32>
    %66 = arith.addf %62, %65 : vector<2x128xf32>
    %c2_54 = arith.constant 2 : index
    %c0_55 = arith.constant 0 : index
    %c0_56 = arith.constant 0 : index
    %67 = vector.load %arg14[%c2_54, %c0_55, %c0_56] : memref<5x1x128xf32, #tpu.memory_space<vmem>>, vector<1x1x128xf32>
    %68 = vector.shape_cast %67 : vector<1x1x128xf32> to vector<1x128xf32>
    %69 = vector.broadcast %68 : vector<1x128xf32> to vector<2x128xf32>
    %70 = arith.addf %66, %69 : vector<2x128xf32>
    %cst_57 = arith.constant 0.000000e+00 : f32
    %71 = vector.broadcast %cst_57 : f32 to vector<2x128xf32>
    %72 = arith.maximumf %70, %71 : vector<2x128xf32>
    %73 = arith.truncf %72 : vector<2x128xf32> to vector<2x128xbf16>
    %c0_58 = arith.constant 0 : index
    %c0_59 = arith.constant 0 : index
    %c0_60 = arith.constant 0 : index
    %74 = vector.load %arg12[%c0_58, %c0_59, %c0_60] : memref<3x128x128xbf16, #tpu.memory_space<vmem>>, vector<1x128x128xbf16>
    %75 = vector.shape_cast %74 : vector<1x128x128xbf16> to vector<128x128xbf16>
    %cst_61 = arith.constant dense<0.000000e+00> : vector<2x128xf32>
    %76 = tpu.matmul %48, %75, %cst_61 {dimension_numbers = #tpu.dot_dimension_numbers<[1], [0], [0], [1], [0, 0, 1, 1], [], []>} : vector<2x128xbf16>, vector<128x128xbf16>, vector<2x128xf32> -> vector<2x128xf32>
    %c1_62 = arith.constant 1 : index
    %c0_63 = arith.constant 0 : index
    %c0_64 = arith.constant 0 : index
    %77 = vector.load %arg12[%c1_62, %c0_63, %c0_64] : memref<3x128x128xbf16, #tpu.memory_space<vmem>>, vector<1x128x128xbf16>
    %78 = vector.shape_cast %77 : vector<1x128x128xbf16> to vector<128x128xbf16>
    %cst_65 = arith.constant dense<0.000000e+00> : vector<2x128xf32>
    %79 = tpu.matmul %50, %78, %cst_65 {dimension_numbers = #tpu.dot_dimension_numbers<[1], [0], [0], [1], [0, 0, 1, 1], [], []>} : vector<2x128xbf16>, vector<128x128xbf16>, vector<2x128xf32> -> vector<2x128xf32>
    %80 = arith.addf %76, %79 : vector<2x128xf32>
    %c2_66 = arith.constant 2 : index
    %c0_67 = arith.constant 0 : index
    %c0_68 = arith.constant 0 : index
    %81 = vector.load %arg12[%c2_66, %c0_67, %c0_68] : memref<3x128x128xbf16, #tpu.memory_space<vmem>>, vector<1x128x128xbf16>
    %82 = vector.shape_cast %81 : vector<1x128x128xbf16> to vector<128x128xbf16>
    %cst_69 = arith.constant dense<0.000000e+00> : vector<2x128xf32>
    %83 = tpu.matmul %73, %82, %cst_69 {dimension_numbers = #tpu.dot_dimension_numbers<[1], [0], [0], [1], [0, 0, 1, 1], [], []>} : vector<2x128xbf16>, vector<128x128xbf16>, vector<2x128xf32> -> vector<2x128xf32>
    %84 = arith.addf %80, %83 : vector<2x128xf32>
    %c3 = arith.constant 3 : index
    %c0_70 = arith.constant 0 : index
    %c0_71 = arith.constant 0 : index
    %85 = vector.load %arg14[%c3, %c0_70, %c0_71] : memref<5x1x128xf32, #tpu.memory_space<vmem>>, vector<1x1x128xf32>
    %86 = vector.shape_cast %85 : vector<1x1x128xf32> to vector<1x128xf32>
    %87 = vector.broadcast %86 : vector<1x128xf32> to vector<2x128xf32>
    %88 = arith.addf %84, %87 : vector<2x128xf32>
    %cst_72 = arith.constant 0.000000e+00 : f32
    %89 = vector.broadcast %cst_72 : f32 to vector<2x128xf32>
    %90 = arith.maximumf %88, %89 : vector<2x128xf32>
    %91 = arith.truncf %90 : vector<2x128xf32> to vector<2x128xbf16>
    %c0_73 = arith.constant 0 : index
    %c0_74 = arith.constant 0 : index
    %92 = vector.load %arg13[%c0_73, %c0_74] : memref<128x128xbf16, #tpu.memory_space<vmem>>, vector<128x128xbf16>
    %cst_75 = arith.constant dense<0.000000e+00> : vector<2x128xf32>
    %93 = tpu.matmul %91, %92, %cst_75 {dimension_numbers = #tpu.dot_dimension_numbers<[1], [0], [0], [1], [0, 0, 1, 1], [], []>} : vector<2x128xbf16>, vector<128x128xbf16>, vector<2x128xf32> -> vector<2x128xf32>
    %c4 = arith.constant 4 : index
    %c0_76 = arith.constant 0 : index
    %c0_77 = arith.constant 0 : index
    %94 = vector.load %arg14[%c4, %c0_76, %c0_77] : memref<5x1x128xf32, #tpu.memory_space<vmem>>, vector<1x1x128xf32>
    %95 = vector.shape_cast %94 : vector<1x1x128xf32> to vector<1x128xf32>
    %96 = vector.broadcast %95 : vector<1x128xf32> to vector<2x128xf32>
    %97 = arith.addf %93, %96 : vector<2x128xf32>
    %98 = vector.extract_strided_slice %97 {offsets = [0, 0], sizes = [2, 6], strides = [1, 1]} : vector<2x128xf32> to vector<2x6xf32>
    %c0_78 = arith.constant 0 : index
    %c0_79 = arith.constant 0 : index
    %99 = vector.load %arg15[%c0_78, %c0_79] : memref<2x6xf32, #tpu.memory_space<vmem>>, vector<2x6xf32>
    %100 = arith.subf %98, %99 : vector<2x6xf32>
    %101 = arith.mulf %100, %100 : vector<2x6xf32>
    %102 = vector.shape_cast %101 : vector<2x6xf32> to vector<1x2x6xf32>
    %cst_80 = arith.constant dense<0.000000e+00> : vector<1xf32>
    %103 = vector.multi_reduction <add>, %102, %cst_80 [1, 2] : vector<1x2x6xf32> to vector<1xf32>
    %104 = vector.shape_cast %103 : vector<1xf32> to vector<1x1x1xf32>
    %105 = vector.extract %104[0, 0, 0] : f32 from vector<1x1x1xf32>
    %cst_81 = arith.constant 0.0833333358 : f32
    %106 = arith.mulf %105, %cst_81 : f32
    %c0_82 = arith.constant 0 : index
    %c0_83 = arith.constant 0 : index
    %107 = memref.load %arg16[%c0_82, %c0_83] : memref<1x1xf32, #tpu.memory_space<smem>>
    memref.store %106, %arg16[%c0_82, %c0_83] : memref<1x1xf32, #tpu.memory_space<smem>>
    return
  }
}

</mosaic_0001>

<llo_original>
// kernel: abil_dt_forward.1
$region0: #{abil_dt_forward.1}
  #allocation0 [shape = 'u32[]', space=smem, size = 0x4, offset = 0x4, fixed_abs, tag = 'smem constant byte address 0x4 - core index']
  #allocation1 [shape = 'u32[144,128]{1,0:T(1,128)}', space=vmem, size = 0x12000, scoped, tag = 'internal scratch']
  %s0 = inlined_call_operand.vmem [shape: bf16[90,128], index: 0, kind: input, shape index: {}]
  %s1 = inlined_call_operand.vmem [shape: bf16[3,40,90], index: 1, kind: input, shape index: {}]
  %s2 = inlined_call_operand.vmem [shape: bf16[384,128], index: 2, kind: input, shape index: {}]
  %s3 = inlined_call_operand.vmem [shape: bf16[3,20,40], index: 3, kind: input, shape index: {}]
  %s4 = inlined_call_operand.vmem [shape: bf16[384,128], index: 4, kind: input, shape index: {}]
  %s5 = inlined_call_operand.vmem [shape: bf16[4,20], index: 5, kind: input, shape index: {}]
  %s6 = inlined_call_operand.vmem [shape: f32[2,24], index: 6, kind: input, shape index: {}]
  %s7 = inlined_call_operand.vmem [shape: f32[2,8], index: 7, kind: input, shape index: {}]
  %s8 = inlined_call_operand.vmem [shape: f32[1,9], index: 8, kind: input, shape index: {}]
  %s9 = inlined_call_operand.vmem [shape: bf16[24,128], index: 9, kind: input, shape index: {}]
  %s10 = inlined_call_operand.vmem [shape: bf16[8,128], index: 10, kind: input, shape index: {}]
  %s11 = inlined_call_operand.vmem [shape: bf16[9,128], index: 11, kind: input, shape index: {}]
  %s12 = inlined_call_operand.vmem [shape: bf16[3,128,128], index: 12, kind: input, shape index: {}]
  %s13 = inlined_call_operand.vmem [shape: bf16[128,128], index: 13, kind: input, shape index: {}]
  %s14 = inlined_call_operand.vmem [shape: f32[5,1,128], index: 14, kind: input, shape index: {}]
  %s15 = inlined_call_operand.vmem [shape: f32[2,6], index: 15, kind: input, shape index: {}]
  %s16 = inlined_call_operand.hbm [shape: f32[1,1], index: 16, kind: output, shape index: {}]
  %s17 = sld [smem:[#allocation0]]
  $region74: #{abil_dt_forward.1} parent=0
    _
  %s19 = ssub.s32 1, %s17
  %s20 = scalar_select 0, %s19, %s17
  $region1: #{abil_dt_forward.1} parent=0
    #allocation2 [shape = 'u8[512]{0}', space=smem, size = 0x200, scoped, tag = 'output window, operand 0, single buffered']
    #allocation3 [shape = 's32[1]{0}', space=sflag, size = 0x4, scoped, tag = 'scoped memory for abil_dt_forward.1']
    %21 = vsyncpa [#allocation3], 0
    // Predicated region
    $region2: #{abil_dt_forward.1} parent=1 // pred_check
      _
    $region3: #{abil_dt_forward.1} parent=1 // pred_check_branch
      %23 = sbr.rel (0) target = $region5
    $region4: #{abil_dt_forward.1} parent=1 // pred_region
      _
    $region5: #{abil_dt_forward.1} parent=1 // pred_fallthru
      _
    // Predicated region
    $region6: #{abil_dt_forward.1} parent=1 // pred_check
      _
    $region7: #{abil_dt_forward.1} parent=1 // pred_check_branch
      %25 = sbr.rel (0) target = $region9
    $region8: #{abil_dt_forward.1} parent=1 // pred_region
      _
    $region9: #{abil_dt_forward.1} parent=1 // pred_fallthru
      _
    // Predicated region
    $region10: #{abil_dt_forward.1} parent=1 // pred_check
      _
    $region11: #{abil_dt_forward.1} parent=1 // pred_check_branch
      %27 = sbr.rel (0) target = $region13
    $region12: #{abil_dt_forward.1} parent=1 // pred_region
      _
    $region13: #{abil_dt_forward.1} parent=1 // pred_fallthru
      _
    // Predicated region
    $region14: #{abil_dt_forward.1} parent=1 // pred_check
      _
    $region15: #{abil_dt_forward.1} parent=1 // pred_check_branch
      %29 = sbr.rel (0) target = $region17
    $region16: #{abil_dt_forward.1} parent=1 // pred_region
      _
    $region17: #{abil_dt_forward.1} parent=1 // pred_fallthru
      _
    // Predicated region
    $region18: #{abil_dt_forward.1} parent=1 // pred_check
      _
    $region19: #{abil_dt_forward.1} parent=1 // pred_check_branch
      %31 = sbr.rel (0) target = $region21
    $region20: #{abil_dt_forward.1} parent=1 // pred_region
      _
    $region21: #{abil_dt_forward.1} parent=1 // pred_fallthru
      _
    // Predicated region
    $region22: #{abil_dt_forward.1} parent=1 // pred_check
      _
    $region23: #{abil_dt_forward.1} parent=1 // pred_check_branch
      %33 = sbr.rel (0) target = $region25
    $region24: #{abil_dt_forward.1} parent=1 // pred_region
      _
    $region25: #{abil_dt_forward.1} parent=1 // pred_fallthru
      _
    // Predicated region
    $region26: #{abil_dt_forward.1} parent=1 // pred_check
      _
    $region27: #{abil_dt_forward.1} parent=1 // pred_check_branch
      %35 = sbr.rel (0) target = $region29
    $region28: #{abil_dt_forward.1} parent=1 // pred_region
      _
    $region29: #{abil_dt_forward.1} parent=1 // pred_fallthru
      _
    // Predicated region
    $region30: #{abil_dt_forward.1} parent=1 // pred_check
      _
    $region31: #{abil_dt_forward.1} parent=1 // pred_check_branch
      %37 = sbr.rel (0) target = $region33
    $region32: #{abil_dt_forward.1} parent=1 // pred_region
      _
    $region33: #{abil_dt_forward.1} parent=1 // pred_fallthru
      _
    // Predicated region
    $region34: #{abil_dt_forward.1} parent=1 // pred_check
      _
    $region35: #{abil_dt_forward.1} parent=1 // pred_check_branch
      %39 = sbr.rel (0) target = $region37
    $region36: #{abil_dt_forward.1} parent=1 // pred_region
      _
    $region37: #{abil_dt_forward.1} parent=1 // pred_fallthru
      _
    // Predicated region
    $region38: #{abil_dt_forward.1} parent=1 // pred_check
      _
    $region39: #{abil_dt_forward.1} parent=1 // pred_check_branch
      %41 = sbr.rel (0) target = $region41
    $region40: #{abil_dt_forward.1} parent=1 // pred_region
      _
    $region41: #{abil_dt_forward.1} parent=1 // pred_fallthru
      _
    // Predicated region
    $region42: #{abil_dt_forward.1} parent=1 // pred_check
      _
    $region43: #{abil_dt_forward.1} parent=1 // pred_check_branch
      %43 = sbr.rel (0) target = $region45
    $region44: #{abil_dt_forward.1} parent=1 // pred_region
      _
    $region45: #{abil_dt_forward.1} parent=1 // pred_fallthru
      _
    // Predicated region
    $region46: #{abil_dt_forward.1} parent=1 // pred_check
      _
    $region47: #{abil_dt_forward.1} parent=1 // pred_check_branch
      %45 = sbr.rel (0) target = $region49
    $region48: #{abil_dt_forward.1} parent=1 // pred_region
      _
    $region49: #{abil_dt_forward.1} parent=1 // pred_fallthru
      _
    // Predicated region
    $region50: #{abil_dt_forward.1} parent=1 // pred_check
      _
    $region51: #{abil_dt_forward.1} parent=1 // pred_check_branch
      %47 = sbr.rel (0) target = $region53
    $region52: #{abil_dt_forward.1} parent=1 // pred_region
      _
    $region53: #{abil_dt_forward.1} parent=1 // pred_fallthru
      _
    // Predicated region
    $region54: #{abil_dt_forward.1} parent=1 // pred_check
      _
    $region55: #{abil_dt_forward.1} parent=1 // pred_check_branch
      %49 = sbr.rel (0) target = $region57
    $region56: #{abil_dt_forward.1} parent=1 // pred_region
      _
    $region57: #{abil_dt_forward.1} parent=1 // pred_fallthru
      _
    // Predicated region
    $region58: #{abil_dt_forward.1} parent=1 // pred_check
      _
    $region59: #{abil_dt_forward.1} parent=1 // pred_check_branch
      %51 = sbr.rel (0) target = $region61
    $region60: #{abil_dt_forward.1} parent=1 // pred_region
      _
    $region61: #{abil_dt_forward.1} parent=1 // pred_fallthru
      _
    // Predicated region
    $region62: #{abil_dt_forward.1} parent=1 // pred_check
      _
    $region63: #{abil_dt_forward.1} parent=1 // pred_check_branch
      %53 = sbr.rel (0) target = $region65
    $region64: #{abil_dt_forward.1} parent=1 // pred_region
      _
    $region65: #{abil_dt_forward.1} parent=1 // pred_fallthru
      _
    %v55 = vld [vmem:[%s0] sm:$0xf]
    %v56 = vld [vmem:[%s0 + $0x4] sm:$0xf]
    %v57 = vld [vmem:[%s0 + $0x8] sm:$0xf]
    %v58 = vld [vmem:[%s0 + $0xc] sm:$0xf]
    %v59 = vld [vmem:[%s0 + $0x10] sm:$0xf]
    %v60 = vld [vmem:[%s0 + $0x14] sm:$0xf]
    %v61 = vld [vmem:[%s0 + $0x18] sm:$0xf]
    %v62 = vld [vmem:[%s0 + $0x1c] sm:$0xf]
    %v63 = vld [vmem:[%s0 + $0x20] sm:$0xf]
    %v64 = vld [vmem:[%s0 + $0x24] sm:$0xf]
    %v65 = vld [vmem:[%s0 + $0x28] sm:$0xf]
    %v66 = vld [vmem:[%s0 + $0x2c] sm:$0x1]
    %v67 = vld [vmem:[%s1] sm:$0xf]
    %v68 = vld [vmem:[%s1 + $0x4] sm:$0xf]
    %v69 = vld [vmem:[%s1 + $0x8] sm:$0xf]
    %v70 = vld [vmem:[%s1 + $0xc] sm:$0xf]
    %v71 = vld [vmem:[%s1 + $0x10] sm:$0xf]
    %v77 = vunpack.c.l.b16 %v67
    %v78 = vunpack.c.l.b16 %v68
    %v79 = vunpack.c.l.b16 %v69
    %v80 = vunpack.c.l.b16 %v70
    %v81 = vunpack.c.l.b16 %v71
    %v82 = vpack.c.b16 %v78, %v77
    %v83 = vpack.c.b16 %v80, %v79
    %v84 = vpack.c.b16 %v81, %v81
    %v97 = vunpack.c.l.b16 %v55
    %v98 = vunpack.c.l.b16 %v56
    %v99 = vunpack.c.l.b16 %v57
    %v100 = vunpack.c.l.b16 %v58
    %v101 = vunpack.c.l.b16 %v59
    %v102 = vunpack.c.l.b16 %v60
    %v103 = vunpack.c.l.b16 %v61
    %v104 = vunpack.c.l.b16 %v62
    %v105 = vunpack.c.l.b16 %v63
    %v106 = vunpack.c.l.b16 %v64
    %v107 = vunpack.c.l.b16 %v65
    %v108 = vunpack.c.l.b16 %v66
    %v109 = vpack.c.b16 %v98, %v97
    %v110 = vpack.c.b16 %v100, %v99
    %v111 = vpack.c.b16 %v102, %v101
    %v112 = vpack.c.b16 %v104, %v103
    %v113 = vpack.c.b16 %v106, %v105
    %v114 = vpack.c.b16 %v108, %v107
    %vm120 = vcmask 736256
    %v122 = vsel %vm120, %v82, 0
    %v125 = vsel %vm120, %v83, 0
    %v128 = vsel %vm120, %v84, 0
    %vm130 = vcmask 1044480
    %v132 = vsel %vm130, %v114, 0
    %134 = vmatprep.subr.bf16.mxu0 0
    %135 = vmatpush1.bf16.msra.mxu0 %v109
    %136 = vmatprep.subr.bf16.mxu0 0
    %137 = vmatpush1.bf16.msra.mxu0 %v110
    %138 = vmatprep.subr.bf16.mxu0 0
    %139 = vmatpush1.bf16.msra.mxu0 %v111
    %140 = vmatprep.subr.bf16.mxu0 0
    %141 = vmatpush1.bf16.msra.mxu0 %v112
    %142 = vmatprep.subr.bf16.mxu0 0
    %143 = vmatpush1.bf16.msra.mxu0 %v113
    %144 = vmatprep.subr.bf16.mxu0 0
    %145 = vmatpush1.bf16.msra.mxu0 %v132
    %146 = vmatprep.subr.bf16.mxu0 0
    %147 = vmatpush1.bf16.msra.mxu0 0
    %148 = vmatprep.subr.bf16.mxu0 0
    %149 = vmatpush1.bf16.msra.mxu0 0
    %150 = vmatprep.subr.bf16.mxu0 0
    %151 = vmatpush1.bf16.msra.mxu0 0
    %152 = vmatprep.subr.bf16.mxu0 0
    %153 = vmatpush1.bf16.msra.mxu0 0
    %154 = vmatprep.subr.bf16.mxu0 0
    %155 = vmatpush1.bf16.msra.mxu0 0
    %156 = vmatprep.subr.bf16.mxu0 0
    %157 = vmatpush1.bf16.msra.mxu0 0
    %158 = vmatprep.subr.bf16.mxu0 0
    %159 = vmatpush1.bf16.msra.mxu0 0
    %160 = vmatprep.subr.bf16.mxu0 0
    %161 = vmatpush1.bf16.msra.mxu0 0
    %162 = vmatprep.subr.bf16.mxu0 0
    %163 = vmatpush1.bf16.msra.mxu0 0
    %164 = vmatprep.subr.bf16.mxu0 0
    %165 = vmatpush1.bf16.msra.mxu0 0
    %166 = vmatprep.mubr.bf16.mxu0 0
    %167 = vmatmul.mubr.bf16.gmra.mrb[0].mxu0 %v122
    %v168 = vpop.f32.mrb[0].mxu0
    %v169 = vadd.f32 0.0, %v168
    %v170 = vpop.f32.mrb[0].mxu0
    %v171 = vpop.f32.mrb[0].mxu0
    %v172 = vadd.f32 0.0, %v171
    %v173 = vpop.f32.mrb[0].mxu0
    %174 = vmatprep.mubr.bf16.mxu0 0
    %175 = vmatmul.mubr.bf16.gmra.mrb[0].mxu0 %v125
    %v176 = vpop.f32.mrb[0].mxu0
    %v177 = vadd.f32 0.0, %v176
    %v178 = vpop.f32.mrb[0].mxu0
    %v179 = vpop.f32.mrb[0].mxu0
    %v180 = vadd.f32 0.0, %v179
    %v181 = vpop.f32.mrb[0].mxu0
    %182 = vmatprep.mubr.bf16.mxu0 0
    %183 = vmatmul.mubr.bf16.gmra.mrb[0].mxu0 %v128
    %v184 = vpop.f32.mrb[0].mxu0
    %v185 = vadd.f32 0.0, %v184
    %v186 = vpop.f32.mrb[0].mxu0
    %v187 = vpop.f32.mrb[0].mxu0
    %v188 = vpop.f32.mrb[0].mxu0
    %189 = vdwg.mxu0
    %v190 = vpack.c.bf16 %v172, %v169
    %v191 = vpack.c.bf16 %v180, %v177
    %v192 = vpack.c.bf16 %v185, %v185
    %s193 = scalar_lea.vmem %s1, 20
    %v194 = vld [vmem:[%s193] sm:$0xf]
    %v195 = vld [vmem:[%s193 + $0x4] sm:$0xf]
    %v196 = vld [vmem:[%s193 + $0x8] sm:$0xf]
    %v197 = vld [vmem:[%s193 + $0xc] sm:$0xf]
    %v198 = vld [vmem:[%s193 + $0x10] sm:$0xf]
    %v204 = vunpack.c.l.b16 %v194
    %v205 = vunpack.c.l.b16 %v195
    %v206 = vunpack.c.l.b16 %v196
    %v207 = vunpack.c.l.b16 %v197
    %v208 = vunpack.c.l.b16 %v198
    %v209 = vpack.c.b16 %v205, %v204
    %v210 = vpack.c.b16 %v207, %v206
    %v211 = vpack.c.b16 %v208, %v208
    %v213 = vsel %vm120, %v209, 0
    %v216 = vsel %vm120, %v210, 0
    %v219 = vsel %vm120, %v211, 0
    %221 = vmatprep.subr.bf16.mxu0 0
    %222 = vmatpush1.bf16.msra.mxu0 %v109
    %223 = vmatprep.subr.bf16.mxu0 0
    %224 = vmatpush1.bf16.msra.mxu0 %v110
    %225 = vmatprep.subr.bf16.mxu0 0
    %226 = vmatpush1.bf16.msra.mxu0 %v111
    %227 = vmatprep.subr.bf16.mxu0 0
    %228 = vmatpush1.bf16.msra.mxu0 %v112
    %229 = vmatprep.subr.bf16.mxu0 0
    %230 = vmatpush1.bf16.msra.mxu0 %v113
    %231 = vmatprep.subr.bf16.mxu0 0
    %232 = vmatpush1.bf16.msra.mxu0 %v132
    %233 = vmatprep.subr.bf16.mxu0 0
    %234 = vmatpush1.bf16.msra.mxu0 0
    %235 = vmatprep.subr.bf16.mxu0 0
    %236 = vmatpush1.bf16.msra.mxu0 0
    %237 = vmatprep.subr.bf16.mxu0 0
    %238 = vmatpush1.bf16.msra.mxu0 0
    %239 = vmatprep.subr.bf16.mxu0 0
    %240 = vmatpush1.bf16.msra.mxu0 0
    %241 = vmatprep.subr.bf16.mxu0 0
    %242 = vmatpush1.bf16.msra.mxu0 0
    %243 = vmatprep.subr.bf16.mxu0 0
    %244 = vmatpush1.bf16.msra.mxu0 0
    %245 = vmatprep.subr.bf16.mxu0 0
    %246 = vmatpush1.bf16.msra.mxu0 0
    %247 = vmatprep.subr.bf16.mxu0 0
    %248 = vmatpush1.bf16.msra.mxu0 0
    %249 = vmatprep.subr.bf16.mxu0 0
    %250 = vmatpush1.bf16.msra.mxu0 0
    %251 = vmatprep.subr.bf16.mxu0 0
    %252 = vmatpush1.bf16.msra.mxu0 0
    %253 = vmatprep.mubr.bf16.mxu0 0
    %254 = vmatmul.mubr.bf16.gmra.mrb[0].mxu0 %v213
    %v255 = vpop.f32.mrb[0].mxu0
    %v256 = vadd.f32 0.0, %v255
    %v257 = vpop.f32.mrb[0].mxu0
    %v258 = vpop.f32.mrb[0].mxu0
    %v259 = vadd.f32 0.0, %v258
    %v260 = vpop.f32.mrb[0].mxu0
    %261 = vmatprep.mubr.bf16.mxu0 0
    %262 = vmatmul.mubr.bf16.gmra.mrb[0].mxu0 %v216
    %v263 = vpop.f32.mrb[0].mxu0
    %v264 = vadd.f32 0.0, %v263
    %v265 = vpop.f32.mrb[0].mxu0
    %v266 = vpop.f32.mrb[0].mxu0
    %v267 = vadd.f32 0.0, %v266
    %v268 = vpop.f32.mrb[0].mxu0
    %269 = vmatprep.mubr.bf16.mxu0 0
    %270 = vmatmul.mubr.bf16.gmra.mrb[0].mxu0 %v219
    %v271 = vpop.f32.mrb[0].mxu0
    %v272 = vadd.f32 0.0, %v271
    %v273 = vpop.f32.mrb[0].mxu0
    %v274 = vpop.f32.mrb[0].mxu0
    %v275 = vpop.f32.mrb[0].mxu0
    %276 = vdwg.mxu0
    %v277 = vpack.c.bf16 %v259, %v256
    %v278 = vpack.c.bf16 %v267, %v264
    %v279 = vpack.c.bf16 %v272, %v272
    %s280 = scalar_lea.vmem %s1, 40
    %v281 = vld [vmem:[%s280] sm:$0xf]
    %v282 = vld [vmem:[%s280 + $0x4] sm:$0xf]
    %v283 = vld [vmem:[%s280 + $0x8] sm:$0xf]
    %v284 = vld [vmem:[%s280 + $0xc] sm:$0xf]
    %v285 = vld [vmem:[%s280 + $0x10] sm:$0xf]
    %v291 = vunpack.c.l.b16 %v281
    %v292 = vunpack.c.l.b16 %v282
    %v293 = vunpack.c.l.b16 %v283
    %v294 = vunpack.c.l.b16 %v284
    %v295 = vunpack.c.l.b16 %v285
    %v296 = vpack.c.b16 %v292, %v291
    %v297 = vpack.c.b16 %v294, %v293
    %v298 = vpack.c.b16 %v295, %v295
    %v300 = vsel %vm120, %v296, 0
    %v303 = vsel %vm120, %v297, 0
    %v306 = vsel %vm120, %v298, 0
    %308 = vmatprep.subr.bf16.mxu0 0
    %309 = vmatpush1.bf16.msra.mxu0 %v109
    %310 = vmatprep.subr.bf16.mxu0 0
    %311 = vmatpush1.bf16.msra.mxu0 %v110
    %312 = vmatprep.subr.bf16.mxu0 0
    %313 = vmatpush1.bf16.msra.mxu0 %v111
    %314 = vmatprep.subr.bf16.mxu0 0
    %315 = vmatpush1.bf16.msra.mxu0 %v112
    %316 = vmatprep.subr.bf16.mxu0 0
    %317 = vmatpush1.bf16.msra.mxu0 %v113
    %318 = vmatprep.subr.bf16.mxu0 0
    %319 = vmatpush1.bf16.msra.mxu0 %v132
    %320 = vmatprep.subr.bf16.mxu0 0
    %321 = vmatpush1.bf16.msra.mxu0 0
    %322 = vmatprep.subr.bf16.mxu0 0
    %323 = vmatpush1.bf16.msra.mxu0 0
    %324 = vmatprep.subr.bf16.mxu0 0
    %325 = vmatpush1.bf16.msra.mxu0 0
    %326 = vmatprep.subr.bf16.mxu0 0
    %327 = vmatpush1.bf16.msra.mxu0 0
    %328 = vmatprep.subr.bf16.mxu0 0
    %329 = vmatpush1.bf16.msra.mxu0 0
    %330 = vmatprep.subr.bf16.mxu0 0
    %331 = vmatpush1.bf16.msra.mxu0 0
    %332 = vmatprep.subr.bf16.mxu0 0
    %333 = vmatpush1.bf16.msra.mxu0 0
    %334 = vmatprep.subr.bf16.mxu0 0
    %335 = vmatpush1.bf16.msra.mxu0 0
    %336 = vmatprep.subr.bf16.mxu0 0
    %337 = vmatpush1.bf16.msra.mxu0 0
    %338 = vmatprep.subr.bf16.mxu0 0
    %339 = vmatpush1.bf16.msra.mxu0 0
    %340 = vmatprep.mubr.bf16.mxu0 0
    %341 = vmatmul.mubr.bf16.gmra.mrb[0].mxu0 %v300
    %v342 = vpop.f32.mrb[0].mxu0
    %v343 = vadd.f32 0.0, %v342
    %v344 = vpop.f32.mrb[0].mxu0
    %v345 = vpop.f32.mrb[0].mxu0
    %v346 = vadd.f32 0.0, %v345
    %v347 = vpop.f32.mrb[0].mxu0
    %348 = vmatprep.mubr.bf16.mxu0 0
    %349 = vmatmul.mubr.bf16.gmra.mrb[0].mxu0 %v303
    %v350 = vpop.f32.mrb[0].mxu0
    %v351 = vadd.f32 0.0, %v350
    %v352 = vpop.f32.mrb[0].mxu0
    %v353 = vpop.f32.mrb[0].mxu0
    %v354 = vadd.f32 0.0, %v353
    %v355 = vpop.f32.mrb[0].mxu0
    %356 = vmatprep.mubr.bf16.mxu0 0
    %357 = vmatmul.mubr.bf16.gmra.mrb[0].mxu0 %v306
    %v358 = vpop.f32.mrb[0].mxu0
    %v359 = vadd.f32 0.0, %v358
    %v360 = vpop.f32.mrb[0].mxu0
    %v361 = vpop.f32.mrb[0].mxu0
    %v362 = vpop.f32.mrb[0].mxu0
    %363 = vdwg.mxu0
    %v364 = vpack.c.bf16 %v346, %v343
    %v365 = vpack.c.bf16 %v354, %v351
    %v366 = vpack.c.bf16 %v359, %v359
    %v367 = vld [vmem:[%s2] sm:$0xf]
    %v368 = vld [vmem:[%s2 + $0x4] sm:$0xf]
    %v369 = vld [vmem:[%s2 + $0x8] sm:$0xf]
    %v370 = vld [vmem:[%s2 + $0xc] sm:$0xf]
    %v371 = vld [vmem:[%s2 + $0x10] sm:$0xf]
    %v372 = vld [vmem:[%s2 + $0x14] sm:$0xf]
    %v373 = vld [vmem:[%s2 + $0x18] sm:$0xf]
    %v374 = vld [vmem:[%s2 + $0x1c] sm:$0xf]
    %v375 = vld [vmem:[%s2 + $0x20] sm:$0xf]
    %v376 = vld [vmem:[%s2 + $0x24] sm:$0xf]
    %v377 = vld [vmem:[%s2 + $0x28] sm:$0xf]
    %v378 = vld [vmem:[%s2 + $0x2c] sm:$0xf]
    %v379 = vld [vmem:[%s2 + $0x30] sm:$0xf]
    %v380 = vld [vmem:[%s2 + $0x34] sm:$0xf]
    %v381 = vld [vmem:[%s2 + $0x38] sm:$0xf]
    %v382 = vld [vmem:[%s2 + $0x3c] sm:$0xf]
    %v383 = vld [vmem:[%s2 + $0x40] sm:$0xf]
    %v384 = vld [vmem:[%s2 + $0x44] sm:$0xf]
    %v385 = vld [vmem:[%s2 + $0x48] sm:$0xf]
    %v386 = vld [vmem:[%s2 + $0x4c] sm:$0xf]
    %v387 = vld [vmem:[%s2 + $0x50] sm:$0xf]
    %v388 = vld [vmem:[%s2 + $0x54] sm:$0xf]
    %v389 = vld [vmem:[%s2 + $0x58] sm:$0xf]
    %v390 = vld [vmem:[%s2 + $0x5c] sm:$0xf]
    %v391 = vld [vmem:[%s2 + $0x60] sm:$0xf]
    %v392 = vld [vmem:[%s2 + $0x64] sm:$0xf]
    %v393 = vld [vmem:[%s2 + $0x68] sm:$0xf]
    %v394 = vld [vmem:[%s2 + $0x6c] sm:$0xf]
    %v395 = vld [vmem:[%s2 + $0x70] sm:$0xf]
    %v396 = vld [vmem:[%s2 + $0x74] sm:$0xf]
    %v397 = vld [vmem:[%s2 + $0x78] sm:$0xf]
    %v398 = vld [vmem:[%s2 + $0x7c] sm:$0xf]
    %v399 = vld [vmem:[%s2 + $0x80] sm:$0xf]
    %v400 = vld [vmem:[%s2 + $0x84] sm:$0xf]
    %v401 = vld [vmem:[%s2 + $0x88] sm:$0xf]
    %v402 = vld [vmem:[%s2 + $0x8c] sm:$0xf]
    %v403 = vld [vmem:[%s2 + $0x90] sm:$0xf]
    %v404 = vld [vmem:[%s2 + $0x94] sm:$0xf]
    %v405 = vld [vmem:[%s2 + $0x98] sm:$0xf]
    %v406 = vld [vmem:[%s2 + $0x9c] sm:$0xf]
    %v407 = vld [vmem:[%s2 + $0xa0] sm:$0xf]
    %v408 = vld [vmem:[%s2 + $0xa4] sm:$0xf]
    %v409 = vld [vmem:[%s2 + $0xa8] sm:$0xf]
    %v410 = vld [vmem:[%s2 + $0xac] sm:$0xf]
    %v411 = vld [vmem:[%s2 + $0xb0] sm:$0xf]
    %v412 = vld [vmem:[%s2 + $0xb4] sm:$0xf]
    %v413 = vld [vmem:[%s2 + $0xb8] sm:$0xf]
    %v414 = vld [vmem:[%s2 + $0xbc] sm:$0xf]
    %v415 = vld [vmem:[%s14] sm:$0x1]
    %v417 = vlaneseq
    %v418 = vshrl.u32 %v417, 7
    %v419 = vsub.s32 0, %v418
    %v420 = vrot.slane %v415, %v419
    %v470 = vunpack.c.l.b16 %v367
    %v471 = vunpack.c.l.b16 %v368
    %v472 = vunpack.c.l.b16 %v369
    %v473 = vunpack.c.l.b16 %v370
    %v474 = vunpack.c.l.b16 %v371
    %v475 = vunpack.c.l.b16 %v372
    %v476 = vunpack.c.l.b16 %v373
    %v477 = vunpack.c.l.b16 %v374
    %v478 = vunpack.c.l.b16 %v375
    %v479 = vunpack.c.l.b16 %v376
    %v480 = vunpack.c.l.b16 %v377
    %v481 = vunpack.c.l.b16 %v378
    %v482 = vunpack.c.l.b16 %v379
    %v483 = vunpack.c.l.b16 %v380
    %v484 = vunpack.c.l.b16 %v381
    %v485 = vunpack.c.l.b16 %v382
    %v486 = vunpack.c.l.b16 %v383
    %v487 = vunpack.c.l.b16 %v384
    %v488 = vunpack.c.l.b16 %v385
    %v489 = vunpack.c.l.b16 %v386
    %v490 = vunpack.c.l.b16 %v387
    %v491 = vunpack.c.l.b16 %v388
    %v492 = vunpack.c.l.b16 %v389
    %v493 = vunpack.c.l.b16 %v390
    %v494 = vunpack.c.l.b16 %v391
    %v495 = vunpack.c.l.b16 %v392
    %v496 = vunpack.c.l.b16 %v393
    %v497 = vunpack.c.l.b16 %v394
    %v498 = vunpack.c.l.b16 %v395
    %v499 = vunpack.c.l.b16 %v396
    %v500 = vunpack.c.l.b16 %v397
    %v501 = vunpack.c.l.b16 %v398
    %v502 = vunpack.c.l.b16 %v399
    %v503 = vunpack.c.l.b16 %v400
    %v504 = vunpack.c.l.b16 %v401
    %v505 = vunpack.c.l.b16 %v402
    %v506 = vunpack.c.l.b16 %v403
    %v507 = vunpack.c.l.b16 %v404
    %v508 = vunpack.c.l.b16 %v405
    %v509 = vunpack.c.l.b16 %v406
    %v510 = vunpack.c.l.b16 %v407
    %v511 = vunpack.c.l.b16 %v408
    %v512 = vunpack.c.l.b16 %v409
    %v513 = vunpack.c.l.b16 %v410
    %v514 = vunpack.c.l.b16 %v411
    %v515 = vunpack.c.l.b16 %v412
    %v516 = vunpack.c.l.b16 %v413
    %v517 = vunpack.c.l.b16 %v414
    %v518 = vpack.c.b16 %v471, %v470
    %v519 = vpack.c.b16 %v473, %v472
    %v520 = vpack.c.b16 %v475, %v474
    %v521 = vpack.c.b16 %v477, %v476
    %v522 = vpack.c.b16 %v479, %v478
    %v523 = vpack.c.b16 %v481, %v480
    %v524 = vpack.c.b16 %v483, %v482
    %v525 = vpack.c.b16 %v485, %v484
    %v526 = vpack.c.b16 %v487, %v486
    %v527 = vpack.c.b16 %v489, %v488
    %v528 = vpack.c.b16 %v491, %v490
    %v529 = vpack.c.b16 %v493, %v492
    %v530 = vpack.c.b16 %v495, %v494
    %v531 = vpack.c.b16 %v497, %v496
    %v532 = vpack.c.b16 %v499, %v498
    %v533 = vpack.c.b16 %v501, %v500
    %v534 = vpack.c.b16 %v503, %v502
    %v535 = vpack.c.b16 %v505, %v504
    %v536 = vpack.c.b16 %v507, %v506
    %v537 = vpack.c.b16 %v509, %v508
    %v538 = vpack.c.b16 %v511, %v510
    %v539 = vpack.c.b16 %v513, %v512
    %v540 = vpack.c.b16 %v515, %v514
    %v541 = vpack.c.b16 %v517, %v516
    %566 = vmatprep.subr.bf16.mxu0 0
    %567 = vmatpush1.bf16.msra.mxu0 %v518
    %568 = vmatprep.subr.bf16.mxu0 0
    %569 = vmatpush1.bf16.msra.mxu0 %v519
    %570 = vmatprep.subr.bf16.mxu0 0
    %571 = vmatpush1.bf16.msra.mxu0 %v520
    %572 = vmatprep.subr.bf16.mxu0 0
    %573 = vmatpush1.bf16.msra.mxu0 %v521
    %574 = vmatprep.subr.bf16.mxu0 0
    %575 = vmatpush1.bf16.msra.mxu0 %v522
    %576 = vmatprep.subr.bf16.mxu0 0
    %577 = vmatpush1.bf16.msra.mxu0 %v523
    %578 = vmatprep.subr.bf16.mxu0 0
    %579 = vmatpush1.bf16.msra.mxu0 %v524
    %580 = vmatprep.subr.bf16.mxu0 0
    %581 = vmatpush1.bf16.msra.mxu0 %v525
    %582 = vmatprep.subr.bf16.mxu0 0
    %583 = vmatpush1.bf16.msra.mxu0 %v526
    %584 = vmatprep.subr.bf16.mxu0 0
    %585 = vmatpush1.bf16.msra.mxu0 %v527
    %586 = vmatprep.subr.bf16.mxu0 0
    %587 = vmatpush1.bf16.msra.mxu0 %v528
    %588 = vmatprep.subr.bf16.mxu0 0
    %589 = vmatpush1.bf16.msra.mxu0 %v529
    %590 = vmatprep.subr.bf16.mxu0 0
    %591 = vmatpush1.bf16.msra.mxu0 %v530
    %592 = vmatprep.subr.bf16.mxu0 0
    %593 = vmatpush1.bf16.msra.mxu0 %v531
    %594 = vmatprep.subr.bf16.mxu0 0
    %595 = vmatpush1.bf16.msra.mxu0 %v532
    %596 = vmatprep.subr.bf16.mxu0 0
    %597 = vmatpush1.bf16.msra.mxu0 %v533
    %598 = vmatprep.mubr.bf16.mxu0 %v277
    %599 = vmatmul.mubr.bf16.gmra.mrb[0].mxu0 %v190
    %v600 = vpop.f32.mrb[0].mxu0
    %v601 = vadd.f32 %v420, %v600
    %v602 = vpop.f32.mrb[0].mxu0
    %v603 = vpop.f32.mrb[0].mxu0
    %v604 = vadd.f32 %v420, %v603
    %v605 = vpop.f32.mrb[0].mxu0
    %606 = vmatprep.mubr.bf16.mxu0 %v278
    %607 = vmatmul.mubr.bf16.gmra.mrb[0].mxu0 %v191
    %v608 = vpop.f32.mrb[0].mxu0
    %v609 = vadd.f32 %v420, %v608
    %v610 = vpop.f32.mrb[0].mxu0
    %v611 = vpop.f32.mrb[0].mxu0
    %v612 = vadd.f32 %v420, %v611
    %v613 = vpop.f32.mrb[0].mxu0
    %614 = vmatprep.mubr.bf16.mxu0 %v279
    %615 = vmatmul.mubr.bf16.gmra.mrb[0].mxu0 %v192
    %v616 = vpop.f32.mrb[0].mxu0
    %v617 = vadd.f32 %v420, %v616
    %v618 = vpop.f32.mrb[0].mxu0
    %v619 = vpop.f32.mrb[0].mxu0
    %v620 = vpop.f32.mrb[0].mxu0
    %621 = vdwg.mxu0
    %622 = vmatprep.subr.bf16.mxu0 0
    %623 = vmatpush1.bf16.msra.mxu0 %v534
    %624 = vmatprep.subr.bf16.mxu0 0
    %625 = vmatpush1.bf16.msra.mxu0 %v535
    %626 = vmatprep.subr.bf16.mxu0 0
    %627 = vmatpush1.bf16.msra.mxu0 %v536
    %628 = vmatprep.subr.bf16.mxu0 0
    %629 = vmatpush1.bf16.msra.mxu0 %v537
    %630 = vmatprep.subr.bf16.mxu0 0
    %631 = vmatpush1.bf16.msra.mxu0 %v538
    %632 = vmatprep.subr.bf16.mxu0 0
    %633 = vmatpush1.bf16.msra.mxu0 %v539
    %634 = vmatprep.subr.bf16.mxu0 0
    %635 = vmatpush1.bf16.msra.mxu0 %v540
    %636 = vmatprep.subr.bf16.mxu0 0
    %637 = vmatpush1.bf16.msra.mxu0 %v541
    %638 = vmatprep.subr.bf16.mxu0 0
    %639 = vmatpush1.bf16.msra.mxu0 0
    %640 = vmatprep.subr.bf16.mxu0 0
    %641 = vmatpush1.bf16.msra.mxu0 0
    %642 = vmatprep.subr.bf16.mxu0 0
    %643 = vmatpush1.bf16.msra.mxu0 0
    %644 = vmatprep.subr.bf16.mxu0 0
    %645 = vmatpush1.bf16.msra.mxu0 0
    %646 = vmatprep.subr.bf16.mxu0 0
    %647 = vmatpush1.bf16.msra.mxu0 0
    %648 = vmatprep.subr.bf16.mxu0 0
    %649 = vmatpush1.bf16.msra.mxu0 0
    %650 = vmatprep.subr.bf16.mxu0 0
    %651 = vmatpush1.bf16.msra.mxu0 0
    %652 = vmatprep.subr.bf16.mxu0 0
    %653 = vmatpush1.bf16.msra.mxu0 0
    %654 = vmatprep.mubr.bf16.mxu0 0
    %655 = vmatmul.mubr.bf16.gmra.mrb[0].mxu0 %v364
    %v656 = vpop.f32.mrb[0].mxu0
    %v657 = vadd.f32 %v601, %v656
    %v658 = vpop.f32.mrb[0].mxu0
    %v659 = vpop.f32.mrb[0].mxu0
    %v660 = vadd.f32 %v604, %v659
    %v661 = vpop.f32.mrb[0].mxu0
    %662 = vmatprep.mubr.bf16.mxu0 0
    %663 = vmatmul.mubr.bf16.gmra.mrb[0].mxu0 %v365
    %v664 = vpop.f32.mrb[0].mxu0
    %v665 = vadd.f32 %v609, %v664
    %v666 = vpop.f32.mrb[0].mxu0
    %v667 = vpop.f32.mrb[0].mxu0
    %v668 = vadd.f32 %v612, %v667
    %v669 = vpop.f32.mrb[0].mxu0
    %670 = vmatprep.mubr.bf16.mxu0 0
    %671 = vmatmul.mubr.bf16.gmra.mrb[0].mxu0 %v366
    %v672 = vpop.f32.mrb[0].mxu0
    %v673 = vadd.f32 %v617, %v672
    %v674 = vpop.f32.mrb[0].mxu0
    %v675 = vpop.f32.mrb[0].mxu0
    %v676 = vpop.f32.mrb[0].mxu0
    %677 = vdwg.mxu0
    %v678 = vmax.f32 %v657, 0.0
    %v679 = vmax.f32 %v660, 0.0
    %v680 = vmax.f32 %v665, 0.0
    %v681 = vmax.f32 %v668, 0.0
    %v682 = vmax.f32 %v673, 0.0
    %v683 = vpack.c.bf16 %v679, %v678
    %v684 = vpack.c.bf16 %v681, %v680
    %v685 = vpack.c.bf16 %v682, %v682
    %v686 = vld [vmem:[%s3] sm:$0xf]
    %v687 = vld [vmem:[%s3 + $0x4] sm:$0xf]
    %v688 = vld [vmem:[%s3 + $0x8] sm:$0x3]
    %v692 = vunpack.c.l.b16 %v686
    %v693 = vunpack.c.l.b16 %v687
    %v694 = vunpack.c.l.b16 %v688
    %v695 = vpack.c.b16 %v693, %v692
    %v696 = vpack.c.b16 %v694, %v694
    %vm697 = vcmask 326656
    %v699 = vsel %vm697, %v695, 0
    %v702 = vsel %vm697, %v696, 0
    %vm704 = vcmask 1043456
    %v706 = vsel %vm704, %v685, 0
    %708 = vmatprep.subr.bf16.mxu0 0
    %709 = vmatpush1.bf16.msra.mxu0 %v683
    %710 = vmatprep.subr.bf16.mxu0 0
    %711 = vmatpush1.bf16.msra.mxu0 %v684
    %712 = vmatprep.subr.bf16.mxu0 0
    %713 = vmatpush1.bf16.msra.mxu0 %v706
    %714 = vmatprep.subr.bf16.mxu0 0
    %715 = vmatpush1.bf16.msra.mxu0 0
    %716 = vmatprep.subr.bf16.mxu0 0
    %717 = vmatpush1.bf16.msra.mxu0 0
    %718 = vmatprep.subr.bf16.mxu0 0
    %719 = vmatpush1.bf16.msra.mxu0 0
    %720 = vmatprep.subr.bf16.mxu0 0
    %721 = vmatpush1.bf16.msra.mxu0 0
    %722 = vmatprep.subr.bf16.mxu0 0
    %723 = vmatpush1.bf16.msra.mxu0 0
    %724 = vmatprep.subr.bf16.mxu0 0
    %725 = vmatpush1.bf16.msra.mxu0 0
    %726 = vmatprep.subr.bf16.mxu0 0
    %727 = vmatpush1.bf16.msra.mxu0 0
    %728 = vmatprep.subr.bf16.mxu0 0
    %729 = vmatpush1.bf16.msra.mxu0 0
    %730 = vmatprep.subr.bf16.mxu0 0
    %731 = vmatpush1.bf16.msra.mxu0 0
    %732 = vmatprep.subr.bf16.mxu0 0
    %733 = vmatpush1.bf16.msra.mxu0 0
    %734 = vmatprep.subr.bf16.mxu0 0
    %735 = vmatpush1.bf16.msra.mxu0 0
    %736 = vmatprep.subr.bf16.mxu0 0
    %737 = vmatpush1.bf16.msra.mxu0 0
    %738 = vmatprep.subr.bf16.mxu0 0
    %739 = vmatpush1.bf16.msra.mxu0 0
    %740 = vmatprep.mubr.bf16.mxu0 0
    %741 = vmatmul.mubr.bf16.gmra.mrb[0].mxu0 %v699
    %v742 = vpop.f32.mrb[0].mxu0
    %v743 = vadd.f32 0.0, %v742
    %v744 = vpop.f32.mrb[0].mxu0
    %v745 = vpop.f32.mrb[0].mxu0
    %v746 = vadd.f32 0.0, %v745
    %v747 = vpop.f32.mrb[0].mxu0
    %748 = vmatprep.mubr.bf16.mxu0 0
    %749 = vmatmul.mubr.bf16.gmra.mrb[0].mxu0 %v702
    %v750 = vpop.f32.mrb[0].mxu0
    %v751 = vadd.f32 0.0, %v750
    %v752 = vpop.f32.mrb[0].mxu0
    %v753 = vpop.f32.mrb[0].mxu0
    %v754 = vpop.f32.mrb[0].mxu0
    %755 = vdwg.mxu0
    %v756 = vpack.c.bf16 %v746, %v743
    %v757 = vpack.c.bf16 %v751, %v751
    %s758 = scalar_lea.vmem %s3, 12
    %v759 = vld [vmem:[%s758] sm:$0xf]
    %v760 = vld [vmem:[%s758 + $0x4] sm:$0xf]
    %v761 = vld [vmem:[%s758 + $0x8] sm:$0x3]
    %v765 = vunpack.c.l.b16 %v759
    %v766 = vunpack.c.l.b16 %v760
    %v767 = vunpack.c.l.b16 %v761
    %v768 = vpack.c.b16 %v766, %v765
    %v769 = vpack.c.b16 %v767, %v767
    %v771 = vsel %vm697, %v768, 0
    %v774 = vsel %vm697, %v769, 0
    %776 = vmatprep.subr.bf16.mxu0 0
    %777 = vmatpush1.bf16.msra.mxu0 %v683
    %778 = vmatprep.subr.bf16.mxu0 0
    %779 = vmatpush1.bf16.msra.mxu0 %v684
    %780 = vmatprep.subr.bf16.mxu0 0
    %781 = vmatpush1.bf16.msra.mxu0 %v706
    %782 = vmatprep.subr.bf16.mxu0 0
    %783 = vmatpush1.bf16.msra.mxu0 0
    %784 = vmatprep.subr.bf16.mxu0 0
    %785 = vmatpush1.bf16.msra.mxu0 0
    %786 = vmatprep.subr.bf16.mxu0 0
    %787 = vmatpush1.bf16.msra.mxu0 0
    %788 = vmatprep.subr.bf16.mxu0 0
    %789 = vmatpush1.bf16.msra.mxu0 0
    %790 = vmatprep.subr.bf16.mxu0 0
    %791 = vmatpush1.bf16.msra.mxu0 0
    %792 = vmatprep.subr.bf16.mxu0 0
    %793 = vmatpush1.bf16.msra.mxu0 0
    %794 = vmatprep.subr.bf16.mxu0 0
    %795 = vmatpush1.bf16.msra.mxu0 0
    %796 = vmatprep.subr.bf16.mxu0 0
    %797 = vmatpush1.bf16.msra.mxu0 0
    %798 = vmatprep.subr.bf16.mxu0 0
    %799 = vmatpush1.bf16.msra.mxu0 0
    %800 = vmatprep.subr.bf16.mxu0 0
    %801 = vmatpush1.bf16.msra.mxu0 0
    %802 = vmatprep.subr.bf16.mxu0 0
    %803 = vmatpush1.bf16.msra.mxu0 0
    %804 = vmatprep.subr.bf16.mxu0 0
    %805 = vmatpush1.bf16.msra.mxu0 0
    %806 = vmatprep.subr.bf16.mxu0 0
    %807 = vmatpush1.bf16.msra.mxu0 0
    %808 = vmatprep.mubr.bf16.mxu0 0
    %809 = vmatmul.mubr.bf16.gmra.mrb[0].mxu0 %v771
    %v810 = vpop.f32.mrb[0].mxu0
    %v811 = vadd.f32 0.0, %v810
    %v812 = vpop.f32.mrb[0].mxu0
    %v813 = vpop.f32.mrb[0].mxu0
    %v814 = vadd.f32 0.0, %v813
    %v815 = vpop.f32.mrb[0].mxu0
    %816 = vmatprep.mubr.bf16.mxu0 0
    %817 = vmatmul.mubr.bf16.gmra.mrb[0].mxu0 %v774
    %v818 = vpop.f32.mrb[0].mxu0
    %v819 = vadd.f32 0.0, %v818
    %v820 = vpop.f32.mrb[0].mxu0
    %v821 = vpop.f32.mrb[0].mxu0
    %v822 = vpop.f32.mrb[0].mxu0
    %823 = vdwg.mxu0
    %v824 = vpack.c.bf16 %v814, %v811
    %v825 = vpack.c.bf16 %v819, %v819
    %s826 = scalar_lea.vmem %s3, 24
    %v827 = vld [vmem:[%s826] sm:$0xf]
    %v828 = vld [vmem:[%s826 + $0x4] sm:$0xf]
    %v829 = vld [vmem:[%s826 + $0x8] sm:$0x3]
    %v833 = vunpack.c.l.b16 %v827
    %v834 = vunpack.c.l.b16 %v828
    %v835 = vunpack.c.l.b16 %v829
    %v836 = vpack.c.b16 %v834, %v833
    %v837 = vpack.c.b16 %v835, %v835
    %v839 = vsel %vm697, %v836, 0
    %v842 = vsel %vm697, %v837, 0
    %844 = vmatprep.subr.bf16.mxu0 0
    %845 = vmatpush1.bf16.msra.mxu0 %v683
    %846 = vmatprep.subr.bf16.mxu0 0
    %847 = vmatpush1.bf16.msra.mxu0 %v684
    %848 = vmatprep.subr.bf16.mxu0 0
    %849 = vmatpush1.bf16.msra.mxu0 %v706
    %850 = vmatprep.subr.bf16.mxu0 0
    %851 = vmatpush1.bf16.msra.mxu0 0
    %852 = vmatprep.subr.bf16.mxu0 0
    %853 = vmatpush1.bf16.msra.mxu0 0
    %854 = vmatprep.subr.bf16.mxu0 0
    %855 = vmatpush1.bf16.msra.mxu0 0
    %856 = vmatprep.subr.bf16.mxu0 0
    %857 = vmatpush1.bf16.msra.mxu0 0
    %858 = vmatprep.subr.bf16.mxu0 0
    %859 = vmatpush1.bf16.msra.mxu0 0
    %860 = vmatprep.subr.bf16.mxu0 0
    %861 = vmatpush1.bf16.msra.mxu0 0
    %862 = vmatprep.subr.bf16.mxu0 0
    %863 = vmatpush1.bf16.msra.mxu0 0
    %864 = vmatprep.subr.bf16.mxu0 0
    %865 = vmatpush1.bf16.msra.mxu0 0
    %866 = vmatprep.subr.bf16.mxu0 0
    %867 = vmatpush1.bf16.msra.mxu0 0
    %868 = vmatprep.subr.bf16.mxu0 0
    %869 = vmatpush1.bf16.msra.mxu0 0
    %870 = vmatprep.subr.bf16.mxu0 0
    %871 = vmatpush1.bf16.msra.mxu0 0
    %872 = vmatprep.subr.bf16.mxu0 0
    %873 = vmatpush1.bf16.msra.mxu0 0
    %874 = vmatprep.subr.bf16.mxu0 0
    %875 = vmatpush1.bf16.msra.mxu0 0
    %876 = vmatprep.mubr.bf16.mxu0 0
    %877 = vmatmul.mubr.bf16.gmra.mrb[0].mxu0 %v839
    %v878 = vpop.f32.mrb[0].mxu0
    %v879 = vadd.f32 0.0, %v878
    %v880 = vpop.f32.mrb[0].mxu0
    %v881 = vpop.f32.mrb[0].mxu0
    %v882 = vadd.f32 0.0, %v881
    %v883 = vpop.f32.mrb[0].mxu0
    %884 = vmatprep.mubr.bf16.mxu0 0
    %885 = vmatmul.mubr.bf16.gmra.mrb[0].mxu0 %v842
    %v886 = vpop.f32.mrb[0].mxu0
    %v887 = vadd.f32 0.0, %v886
    %v888 = vpop.f32.mrb[0].mxu0
    %v889 = vpop.f32.mrb[0].mxu0
    %v890 = vpop.f32.mrb[0].mxu0
    %891 = vdwg.mxu0
    %v892 = vpack.c.bf16 %v882, %v879
    %v893 = vpack.c.bf16 %v887, %v887
    %v894 = vld [vmem:[%s4] sm:$0xf]
    %v895 = vld [vmem:[%s4 + $0x4] sm:$0xf]
    %v896 = vld [vmem:[%s4 + $0x8] sm:$0xf]
    %v897 = vld [vmem:[%s4 + $0xc] sm:$0xf]
    %v898 = vld [vmem:[%s4 + $0x10] sm:$0xf]
    %v899 = vld [vmem:[%s4 + $0x14] sm:$0xf]
    %v900 = vld [vmem:[%s4 + $0x18] sm:$0xf]
    %v901 = vld [vmem:[%s4 + $0x1c] sm:$0xf]
    %v902 = vld [vmem:[%s4 + $0x20] sm:$0xf]
    %v903 = vld [vmem:[%s4 + $0x24] sm:$0xf]
    %v904 = vld [vmem:[%s4 + $0x28] sm:$0xf]
    %v905 = vld [vmem:[%s4 + $0x2c] sm:$0xf]
    %v906 = vld [vmem:[%s4 + $0x30] sm:$0xf]
    %v907 = vld [vmem:[%s4 + $0x34] sm:$0xf]
    %v908 = vld [vmem:[%s4 + $0x38] sm:$0xf]
    %v909 = vld [vmem:[%s4 + $0x3c] sm:$0xf]
    %v910 = vld [vmem:[%s4 + $0x40] sm:$0xf]
    %v911 = vld [vmem:[%s4 + $0x44] sm:$0xf]
    %v912 = vld [vmem:[%s4 + $0x48] sm:$0xf]
    %v913 = vld [vmem:[%s4 + $0x4c] sm:$0xf]
    %v914 = vld [vmem:[%s4 + $0x50] sm:$0xf]
    %v915 = vld [vmem:[%s4 + $0x54] sm:$0xf]
    %v916 = vld [vmem:[%s4 + $0x58] sm:$0xf]
    %v917 = vld [vmem:[%s4 + $0x5c] sm:$0xf]
    %v918 = vld [vmem:[%s4 + $0x60] sm:$0xf]
    %v919 = vld [vmem:[%s4 + $0x64] sm:$0xf]
    %v920 = vld [vmem:[%s4 + $0x68] sm:$0xf]
    %v921 = vld [vmem:[%s4 + $0x6c] sm:$0xf]
    %v922 = vld [vmem:[%s4 + $0x70] sm:$0xf]
    %v923 = vld [vmem:[%s4 + $0x74] sm:$0xf]
    %v924 = vld [vmem:[%s4 + $0x78] sm:$0xf]
    %v925 = vld [vmem:[%s4 + $0x7c] sm:$0xf]
    %v926 = vld [vmem:[%s4 + $0x80] sm:$0xf]
    %v927 = vld [vmem:[%s4 + $0x84] sm:$0xf]
    %v928 = vld [vmem:[%s4 + $0x88] sm:$0xf]
    %v929 = vld [vmem:[%s4 + $0x8c] sm:$0xf]
    %v930 = vld [vmem:[%s4 + $0x90] sm:$0xf]
    %v931 = vld [vmem:[%s4 + $0x94] sm:$0xf]
    %v932 = vld [vmem:[%s4 + $0x98] sm:$0xf]
    %v933 = vld [vmem:[%s4 + $0x9c] sm:$0xf]
    %v934 = vld [vmem:[%s4 + $0xa0] sm:$0xf]
    %v935 = vld [vmem:[%s4 + $0xa4] sm:$0xf]
    %v936 = vld [vmem:[%s4 + $0xa8] sm:$0xf]
    %v937 = vld [vmem:[%s4 + $0xac] sm:$0xf]
    %v938 = vld [vmem:[%s4 + $0xb0] sm:$0xf]
    %v939 = vld [vmem:[%s4 + $0xb4] sm:$0xf]
    %v940 = vld [vmem:[%s4 + $0xb8] sm:$0xf]
    %v941 = vld [vmem:[%s4 + $0xbc] sm:$0xf]
    %s942 = scalar_lea.vmem %s14, 1
    %v943 = vld [vmem:[%s942] sm:$0x1]
    %v945 = vlaneseq
    %v946 = vshrl.u32 %v945, 7
    %v947 = vsub.s32 0, %v946
    %v948 = vrot.slane %v943, %v947
    %v998 = vunpack.c.l.b16 %v894
    %v999 = vunpack.c.l.b16 %v895
    %v1000 = vunpack.c.l.b16 %v896
    %v1001 = vunpack.c.l.b16 %v897
    %v1002 = vunpack.c.l.b16 %v898
    %v1003 = vunpack.c.l.b16 %v899
    %v1004 = vunpack.c.l.b16 %v900
    %v1005 = vunpack.c.l.b16 %v901
    %v1006 = vunpack.c.l.b16 %v902
    %v1007 = vunpack.c.l.b16 %v903
    %v1008 = vunpack.c.l.b16 %v904
    %v1009 = vunpack.c.l.b16 %v905
    %v1010 = vunpack.c.l.b16 %v906
    %v1011 = vunpack.c.l.b16 %v907
    %v1012 = vunpack.c.l.b16 %v908
    %v1013 = vunpack.c.l.b16 %v909
    %v1014 = vunpack.c.l.b16 %v910
    %v1015 = vunpack.c.l.b16 %v911
    %v1016 = vunpack.c.l.b16 %v912
    %v1017 = vunpack.c.l.b16 %v913
    %v1018 = vunpack.c.l.b16 %v914
    %v1019 = vunpack.c.l.b16 %v915
    %v1020 = vunpack.c.l.b16 %v916
    %v1021 = vunpack.c.l.b16 %v917
    %v1022 = vunpack.c.l.b16 %v918
    %v1023 = vunpack.c.l.b16 %v919
    %v1024 = vunpack.c.l.b16 %v920
    %v1025 = vunpack.c.l.b16 %v921
    %v1026 = vunpack.c.l.b16 %v922
    %v1027 = vunpack.c.l.b16 %v923
    %v1028 = vunpack.c.l.b16 %v924
    %v1029 = vunpack.c.l.b16 %v925
    %v1030 = vunpack.c.l.b16 %v926
    %v1031 = vunpack.c.l.b16 %v927
    %v1032 = vunpack.c.l.b16 %v928
    %v1033 = vunpack.c.l.b16 %v929
    %v1034 = vunpack.c.l.b16 %v930
    %v1035 = vunpack.c.l.b16 %v931
    %v1036 = vunpack.c.l.b16 %v932
    %v1037 = vunpack.c.l.b16 %v933
    %v1038 = vunpack.c.l.b16 %v934
    %v1039 = vunpack.c.l.b16 %v935
    %v1040 = vunpack.c.l.b16 %v936
    %v1041 = vunpack.c.l.b16 %v937
    %v1042 = vunpack.c.l.b16 %v938
    %v1043 = vunpack.c.l.b16 %v939
    %v1044 = vunpack.c.l.b16 %v940
    %v1045 = vunpack.c.l.b16 %v941
    %v1046 = vpack.c.b16 %v999, %v998
    %v1047 = vpack.c.b16 %v1001, %v1000
    %v1048 = vpack.c.b16 %v1003, %v1002
    %v1049 = vpack.c.b16 %v1005, %v1004
    %v1050 = vpack.c.b16 %v1007, %v1006
    %v1051 = vpack.c.b16 %v1009, %v1008
    %v1052 = vpack.c.b16 %v1011, %v1010
    %v1053 = vpack.c.b16 %v1013, %v1012
    %v1054 = vpack.c.b16 %v1015, %v1014
    %v1055 = vpack.c.b16 %v1017, %v1016
    %v1056 = vpack.c.b16 %v1019, %v1018
    %v1057 = vpack.c.b16 %v1021, %v1020
    %v1058 = vpack.c.b16 %v1023, %v1022
    %v1059 = vpack.c.b16 %v1025, %v1024
    %v1060 = vpack.c.b16 %v1027, %v1026
    %v1061 = vpack.c.b16 %v1029, %v1028
    %v1062 = vpack.c.b16 %v1031, %v1030
    %v1063 = vpack.c.b16 %v1033, %v1032
    %v1064 = vpack.c.b16 %v1035, %v1034
    %v1065 = vpack.c.b16 %v1037, %v1036
    %v1066 = vpack.c.b16 %v1039, %v1038
    %v1067 = vpack.c.b16 %v1041, %v1040
    %v1068 = vpack.c.b16 %v1043, %v1042
    %v1069 = vpack.c.b16 %v1045, %v1044
    %1094 = vmatprep.subr.bf16.mxu0 0
    %1095 = vmatpush1.bf16.msra.mxu0 %v1046
    %1096 = vmatprep.subr.bf16.mxu0 0
    %1097 = vmatpush1.bf16.msra.mxu0 %v1047
    %1098 = vmatprep.subr.bf16.mxu0 0
    %1099 = vmatpush1.bf16.msra.mxu0 %v1048
    %1100 = vmatprep.subr.bf16.mxu0 0
    %1101 = vmatpush1.bf16.msra.mxu0 %v1049
    %1102 = vmatprep.subr.bf16.mxu0 0
    %1103 = vmatpush1.bf16.msra.mxu0 %v1050
    %1104 = vmatprep.subr.bf16.mxu0 0
    %1105 = vmatpush1.bf16.msra.mxu0 %v1051
    %1106 = vmatprep.subr.bf16.mxu0 0
    %1107 = vmatpush1.bf16.msra.mxu0 %v1052
    %1108 = vmatprep.subr.bf16.mxu0 0
    %1109 = vmatpush1.bf16.msra.mxu0 %v1053
    %1110 = vmatprep.subr.bf16.mxu0 0
    %1111 = vmatpush1.bf16.msra.mxu0 %v1054
    %1112 = vmatprep.subr.bf16.mxu0 0
    %1113 = vmatpush1.bf16.msra.mxu0 %v1055
    %1114 = vmatprep.subr.bf16.mxu0 0
    %1115 = vmatpush1.bf16.msra.mxu0 %v1056
    %1116 = vmatprep.subr.bf16.mxu0 0
    %1117 = vmatpush1.bf16.msra.mxu0 %v1057
    %1118 = vmatprep.subr.bf16.mxu0 0
    %1119 = vmatpush1.bf16.msra.mxu0 %v1058
    %1120 = vmatprep.subr.bf16.mxu0 0
    %1121 = vmatpush1.bf16.msra.mxu0 %v1059
    %1122 = vmatprep.subr.bf16.mxu0 0
    %1123 = vmatpush1.bf16.msra.mxu0 %v1060
    %1124 = vmatprep.subr.bf16.mxu0 0
    %1125 = vmatpush1.bf16.msra.mxu0 %v1061
    %1126 = vmatprep.mubr.bf16.mxu0 %v824
    %1127 = vmatmul.mubr.bf16.gmra.mrb[0].mxu0 %v756
    %v1128 = vpop.f32.mrb[0].mxu0
    %v1129 = vadd.f32 %v948, %v1128
    %v1130 = vpop.f32.mrb[0].mxu0
    %v1131 = vpop.f32.mrb[0].mxu0
    %v1132 = vadd.f32 %v948, %v1131
    %v1133 = vpop.f32.mrb[0].mxu0
    %1134 = vmatprep.mubr.bf16.mxu0 %v825
    %1135 = vmatmul.mubr.bf16.gmra.mrb[0].mxu0 %v757
    %v1136 = vpop.f32.mrb[0].mxu0
    %v1137 = vadd.f32 %v948, %v1136
    %v1138 = vpop.f32.mrb[0].mxu0
    %v1139 = vpop.f32.mrb[0].mxu0
    %v1140 = vpop.f32.mrb[0].mxu0
    %1141 = vdwg.mxu0
    %1142 = vmatprep.subr.bf16.mxu0 0
    %1143 = vmatpush1.bf16.msra.mxu0 %v1062
    %1144 = vmatprep.subr.bf16.mxu0 0
    %1145 = vmatpush1.bf16.msra.mxu0 %v1063
    %1146 = vmatprep.subr.bf16.mxu0 0
    %1147 = vmatpush1.bf16.msra.mxu0 %v1064
    %1148 = vmatprep.subr.bf16.mxu0 0
    %1149 = vmatpush1.bf16.msra.mxu0 %v1065
    %1150 = vmatprep.subr.bf16.mxu0 0
    %1151 = vmatpush1.bf16.msra.mxu0 %v1066
    %1152 = vmatprep.subr.bf16.mxu0 0
    %1153 = vmatpush1.bf16.msra.mxu0 %v1067
    %1154 = vmatprep.subr.bf16.mxu0 0
    %1155 = vmatpush1.bf16.msra.mxu0 %v1068
    %1156 = vmatprep.subr.bf16.mxu0 0
    %1157 = vmatpush1.bf16.msra.mxu0 %v1069
    %1158 = vmatprep.subr.bf16.mxu0 0
    %1159 = vmatpush1.bf16.msra.mxu0 0
    %1160 = vmatprep.subr.bf16.mxu0 0
    %1161 = vmatpush1.bf16.msra.mxu0 0
    %1162 = vmatprep.subr.bf16.mxu0 0
    %1163 = vmatpush1.bf16.msra.mxu0 0
    %1164 = vmatprep.subr.bf16.mxu0 0
    %1165 = vmatpush1.bf16.msra.mxu0 0
    %1166 = vmatprep.subr.bf16.mxu0 0
    %1167 = vmatpush1.bf16.msra.mxu0 0
    %1168 = vmatprep.subr.bf16.mxu0 0
    %1169 = vmatpush1.bf16.msra.mxu0 0
    %1170 = vmatprep.subr.bf16.mxu0 0
    %1171 = vmatpush1.bf16.msra.mxu0 0
    %1172 = vmatprep.subr.bf16.mxu0 0
    %1173 = vmatpush1.bf16.msra.mxu0 0
    %1174 = vmatprep.mubr.bf16.mxu0 0
    %1175 = vmatmul.mubr.bf16.gmra.mrb[0].mxu0 %v892
    %v1176 = vpop.f32.mrb[0].mxu0
    %v1177 = vadd.f32 %v1129, %v1176
    %v1178 = vpop.f32.mrb[0].mxu0
    %v1179 = vpop.f32.mrb[0].mxu0
    %v1180 = vadd.f32 %v1132, %v1179
    %v1181 = vpop.f32.mrb[0].mxu0
    %1182 = vmatprep.mubr.bf16.mxu0 0
    %1183 = vmatmul.mubr.bf16.gmra.mrb[0].mxu0 %v893
    %v1184 = vpop.f32.mrb[0].mxu0
    %v1185 = vadd.f32 %v1137, %v1184
    %v1186 = vpop.f32.mrb[0].mxu0
    %v1187 = vpop.f32.mrb[0].mxu0
    %v1188 = vpop.f32.mrb[0].mxu0
    %1189 = vdwg.mxu0
    %v1190 = vmax.f32 %v1177, 0.0
    %v1191 = vmax.f32 %v1180, 0.0
    %v1192 = vmax.f32 %v1185, 0.0
    %v1193 = vpack.c.bf16 %v1191, %v1190
    %v1194 = vpack.c.bf16 %v1192, %v1192
    %v1195 = vld [vmem:[%s5] sm:$0x3]
    %vm1196 = vcmask 162816
    %v1198 = vsel %vm1196, %v1195, 0
    %vm1200 = vcmask 1041408
    %v1202 = vsel %vm1200, %v1194, 0
    %1204 = vmatprep.subr.bf16.mxu0 0
    %1205 = vmatpush1.bf16.msra.mxu0 %v1193
    %1206 = vmatprep.subr.bf16.mxu0 0
    %1207 = vmatpush1.bf16.msra.mxu0 %v1202
    %1208 = vmatprep.subr.bf16.mxu0 0
    %1209 = vmatpush1.bf16.msra.mxu0 0
    %1210 = vmatprep.subr.bf16.mxu0 0
    %1211 = vmatpush1.bf16.msra.mxu0 0
    %1212 = vmatprep.subr.bf16.mxu0 0
    %1213 = vmatpush1.bf16.msra.mxu0 0
    %1214 = vmatprep.subr.bf16.mxu0 0
    %1215 = vmatpush1.bf16.msra.mxu0 0
    %1216 = vmatprep.subr.bf16.mxu0 0
    %1217 = vmatpush1.bf16.msra.mxu0 0
    %1218 = vmatprep.subr.bf16.mxu0 0
    %1219 = vmatpush1.bf16.msra.mxu0 0
    %1220 = vmatprep.subr.bf16.mxu0 0
    %1221 = vmatpush1.bf16.msra.mxu0 0
    %1222 = vmatprep.subr.bf16.mxu0 0
    %1223 = vmatpush1.bf16.msra.mxu0 0
    %1224 = vmatprep.subr.bf16.mxu0 0
    %1225 = vmatpush1.bf16.msra.mxu0 0
    %1226 = vmatprep.subr.bf16.mxu0 0
    %1227 = vmatpush1.bf16.msra.mxu0 0
    %1228 = vmatprep.subr.bf16.mxu0 0
    %1229 = vmatpush1.bf16.msra.mxu0 0
    %1230 = vmatprep.subr.bf16.mxu0 0
    %1231 = vmatpush1.bf16.msra.mxu0 0
    %1232 = vmatprep.subr.bf16.mxu0 0
    %1233 = vmatpush1.bf16.msra.mxu0 0
    %1234 = vmatprep.subr.bf16.mxu0 0
    %1235 = vmatpush1.bf16.msra.mxu0 0
    %1236 = vmatprep.mubr.bf16.mxu0 0
    %1237 = vmatmul.mubr.bf16.gmra.mrb[0].mxu0 %v1198
    %v1238 = vpop.f32.mrb[0].mxu0
    %v1239 = vadd.f32 0.0, %v1238
    %v1240 = vpop.f32.mrb[0].mxu0
    %v1241 = vpop.f32.mrb[0].mxu0
    %v1242 = vpop.f32.mrb[0].mxu0
    %1243 = vdwg.mxu0
    %v1244 = vpack.c.bf16 %v1239, %v1239
    %v1245 = vld [vmem:[%s8] sm:$0x1]
    %v1247 = vlaneseq
    %v1248 = vshrl.u32 %v1247, 7
    %v1249 = vsub.s32 0, %v1248
    %v1250 = vrot.slane %v1245, %v1249
    %v1252 = vld [vmem:[%s6] sm:$0x3]
    %v1253 = vpack.c.bf16 %v1252, %v1252
    %v1254 = vld [vmem:[%s9] sm:$0xf]
    %v1255 = vld [vmem:[%s9 + $0x4] sm:$0xf]
    %v1256 = vld [vmem:[%s9 + $0x8] sm:$0xf]
    %v1257 = vld [vmem:[%s7] sm:$0x3]
    %v1258 = vpack.c.bf16 %v1257, %v1257
    %v1259 = vld [vmem:[%s10] sm:$0xf]
    %vm1260 = vcmask 64512
    %v1262 = vsel %vm1260, %v1258, 0
    %v1265 = vsel %vm704, %v1259, 0
    %1267 = vmatprep.subr.bf16.mxu0 0
    %1268 = vmatpush1.bf16.msra.mxu0 %v1265
    %1269 = vmatprep.subr.bf16.mxu0 0
    %1270 = vmatpush1.bf16.msra.mxu0 0
    %1271 = vmatprep.subr.bf16.mxu0 0
    %1272 = vmatpush1.bf16.msra.mxu0 0
    %1273 = vmatprep.subr.bf16.mxu0 0
    %1274 = vmatpush1.bf16.msra.mxu0 0
    %1275 = vmatprep.subr.bf16.mxu0 0
    %1276 = vmatpush1.bf16.msra.mxu0 0
    %1277 = vmatprep.subr.bf16.mxu0 0
    %1278 = vmatpush1.bf16.msra.mxu0 0
    %1279 = vmatprep.subr.bf16.mxu0 0
    %1280 = vmatpush1.bf16.msra.mxu0 0
    %1281 = vmatprep.subr.bf16.mxu0 0
    %1282 = vmatpush1.bf16.msra.mxu0 0
    %1283 = vmatprep.subr.bf16.mxu0 0
    %1284 = vmatpush1.bf16.msra.mxu0 0
    %1285 = vmatprep.subr.bf16.mxu0 0
    %1286 = vmatpush1.bf16.msra.mxu0 0
    %1287 = vmatprep.subr.bf16.mxu0 0
    %1288 = vmatpush1.bf16.msra.mxu0 0
    %1289 = vmatprep.subr.bf16.mxu0 0
    %1290 = vmatpush1.bf16.msra.mxu0 0
    %1291 = vmatprep.subr.bf16.mxu0 0
    %1292 = vmatpush1.bf16.msra.mxu0 0
    %1293 = vmatprep.subr.bf16.mxu0 0
    %1294 = vmatpush1.bf16.msra.mxu0 0
    %1295 = vmatprep.subr.bf16.mxu0 0
    %1296 = vmatpush1.bf16.msra.mxu0 0
    %1297 = vmatprep.subr.bf16.mxu0 0
    %1298 = vmatpush1.bf16.msra.mxu0 0
    %1299 = vmatprep.mubr.bf16.mxu0 0
    %1300 = vmatmul.mubr.bf16.gmra.mrb[0].mxu0 %v1262
    %v1301 = vpop.f32.mrb[0].mxu0
    %v1302 = vadd.f32 0.0, %v1301
    %v1303 = vpop.f32.mrb[0].mxu0
    %v1304 = vpop.f32.mrb[0].mxu0
    %v1305 = vpop.f32.mrb[0].mxu0
    %1306 = vdwg.mxu0
    %v1310 = vunpack.c.l.b16 %v1254
    %v1311 = vunpack.c.l.b16 %v1255
    %v1312 = vunpack.c.l.b16 %v1256
    %v1313 = vpack.c.b16 %v1311, %v1310
    %v1314 = vpack.c.b16 %v1312, %v1312
    %vm1316 = vcmask 195584
    %v1318 = vsel %vm1316, %v1253, 0
    %v1321 = vsel %vm704, %v1314, 0
    %1323 = vmatprep.subr.bf16.mxu0 0
    %1324 = vmatpush1.bf16.msra.mxu0 %v1313
    %1325 = vmatprep.subr.bf16.mxu0 0
    %1326 = vmatpush1.bf16.msra.mxu0 %v1321
    %1327 = vmatprep.subr.bf16.mxu0 0
    %1328 = vmatpush1.bf16.msra.mxu0 0
    %1329 = vmatprep.subr.bf16.mxu0 0
    %1330 = vmatpush1.bf16.msra.mxu0 0
    %1331 = vmatprep.subr.bf16.mxu0 0
    %1332 = vmatpush1.bf16.msra.mxu0 0
    %1333 = vmatprep.subr.bf16.mxu0 0
    %1334 = vmatpush1.bf16.msra.mxu0 0
    %1335 = vmatprep.subr.bf16.mxu0 0
    %1336 = vmatpush1.bf16.msra.mxu0 0
    %1337 = vmatprep.subr.bf16.mxu0 0
    %1338 = vmatpush1.bf16.msra.mxu0 0
    %1339 = vmatprep.subr.bf16.mxu0 0
    %1340 = vmatpush1.bf16.msra.mxu0 0
    %1341 = vmatprep.subr.bf16.mxu0 0
    %1342 = vmatpush1.bf16.msra.mxu0 0
    %1343 = vmatprep.subr.bf16.mxu0 0
    %1344 = vmatpush1.bf16.msra.mxu0 0
    %1345 = vmatprep.subr.bf16.mxu0 0
    %1346 = vmatpush1.bf16.msra.mxu0 0
    %1347 = vmatprep.subr.bf16.mxu0 0
    %1348 = vmatpush1.bf16.msra.mxu0 0
    %1349 = vmatprep.subr.bf16.mxu0 0
    %1350 = vmatpush1.bf16.msra.mxu0 0
    %1351 = vmatprep.subr.bf16.mxu0 0
    %1352 = vmatpush1.bf16.msra.mxu0 0
    %1353 = vmatprep.subr.bf16.mxu0 0
    %1354 = vmatpush1.bf16.msra.mxu0 0
    %1355 = vmatprep.mubr.bf16.mxu0 0
    %1356 = vmatmul.mubr.bf16.gmra.mrb[0].mxu0 %v1318
    %v1357 = vpop.f32.mrb[0].mxu0
    %v1358 = vadd.f32 %v1302, %v1357
    %v1359 = vpop.f32.mrb[0].mxu0
    %v1360 = vpop.f32.mrb[0].mxu0
    %v1361 = vpop.f32.mrb[0].mxu0
    %1362 = vdwg.mxu0
    %v1363 = vpack.c.bf16 %v1250, %v1250
    %v1364 = vld [vmem:[%s11] sm:$0xf]
    %v1365 = vld [vmem:[%s11 + $0x4] sm:$0x1]
    %v1368 = vunpack.c.l.b16 %v1364
    %v1369 = vunpack.c.l.b16 %v1365
    %v1370 = vpack.c.b16 %v1369, %v1368
    %vm1371 = vcmask 72704
    %v1373 = vsel %vm1371, %v1363, 0
    %v1375 = vsel %vm704, 4294967295, 65535
    %v1376 = vsel %vm130, %v1375, 0
    %v1378 = vand.u32 %v1370, %v1376
    %1380 = vmatprep.subr.bf16.mxu0 0
    %1381 = vmatpush1.bf16.msra.mxu0 %v1378
    %1382 = vmatprep.subr.bf16.mxu0 0
    %1383 = vmatpush1.bf16.msra.mxu0 0
    %1384 = vmatprep.subr.bf16.mxu0 0
    %1385 = vmatpush1.bf16.msra.mxu0 0
    %1386 = vmatprep.subr.bf16.mxu0 0
    %1387 = vmatpush1.bf16.msra.mxu0 0
    %1388 = vmatprep.subr.bf16.mxu0 0
    %1389 = vmatpush1.bf16.msra.mxu0 0
    %1390 = vmatprep.subr.bf16.mxu0 0
    %1391 = vmatpush1.bf16.msra.mxu0 0
    %1392 = vmatprep.subr.bf16.mxu0 0
    %1393 = vmatpush1.bf16.msra.mxu0 0
    %1394 = vmatprep.subr.bf16.mxu0 0
    %1395 = vmatpush1.bf16.msra.mxu0 0
    %1396 = vmatprep.subr.bf16.mxu0 0
    %1397 = vmatpush1.bf16.msra.mxu0 0
    %1398 = vmatprep.subr.bf16.mxu0 0
    %1399 = vmatpush1.bf16.msra.mxu0 0
    %1400 = vmatprep.subr.bf16.mxu0 0
    %1401 = vmatpush1.bf16.msra.mxu0 0
    %1402 = vmatprep.subr.bf16.mxu0 0
    %1403 = vmatpush1.bf16.msra.mxu0 0
    %1404 = vmatprep.subr.bf16.mxu0 0
    %1405 = vmatpush1.bf16.msra.mxu0 0
    %1406 = vmatprep.subr.bf16.mxu0 0
    %1407 = vmatpush1.bf16.msra.mxu0 0
    %1408 = vmatprep.subr.bf16.mxu0 0
    %1409 = vmatpush1.bf16.msra.mxu0 0
    %1410 = vmatprep.subr.bf16.mxu0 0
    %1411 = vmatpush1.bf16.msra.mxu0 0
    %1412 = vmatprep.mubr.bf16.mxu0 0
    %1413 = vmatmul.mubr.bf16.gmra.mrb[0].mxu0 %v1373
    %v1414 = vpop.f32.mrb[0].mxu0
    %v1415 = vadd.f32 0.0, %v1414
    %v1416 = vpop.f32.mrb[0].mxu0
    %v1417 = vpop.f32.mrb[0].mxu0
    %v1418 = vpop.f32.mrb[0].mxu0
    %1419 = vdwg.mxu0
    %v1420 = vadd.f32 %v1358, %v1415
    %s1421 = scalar_lea.vmem %s14, 2
    %v1422 = vld [vmem:[%s1421] sm:$0x1]
    %v1424 = vlaneseq
    %v1425 = vshrl.u32 %v1424, 7
    %v1426 = vsub.s32 0, %v1425
    %v1427 = vrot.slane %v1422, %v1426
    %v1429 = vadd.f32 %v1420, %v1427
    %v1430 = vmax.f32 %v1429, 0.0
    %v1431 = vpack.c.bf16 %v1430, %v1430
    %v1432 = vld [vmem:[%s12] sm:$0xf]
    %v1433 = vld [vmem:[%s12 + $0x4] sm:$0xf]
    %v1434 = vld [vmem:[%s12 + $0x8] sm:$0xf]
    %v1435 = vld [vmem:[%s12 + $0xc] sm:$0xf]
    %v1436 = vld [vmem:[%s12 + $0x10] sm:$0xf]
    %v1437 = vld [vmem:[%s12 + $0x14] sm:$0xf]
    %v1438 = vld [vmem:[%s12 + $0x18] sm:$0xf]
    %v1439 = vld [vmem:[%s12 + $0x1c] sm:$0xf]
    %v1440 = vld [vmem:[%s12 + $0x20] sm:$0xf]
    %v1441 = vld [vmem:[%s12 + $0x24] sm:$0xf]
    %v1442 = vld [vmem:[%s12 + $0x28] sm:$0xf]
    %v1443 = vld [vmem:[%s12 + $0x2c] sm:$0xf]
    %v1444 = vld [vmem:[%s12 + $0x30] sm:$0xf]
    %v1445 = vld [vmem:[%s12 + $0x34] sm:$0xf]
    %v1446 = vld [vmem:[%s12 + $0x38] sm:$0xf]
    %v1447 = vld [vmem:[%s12 + $0x3c] sm:$0xf]
    %s1448 = scalar_lea.vmem %s12, 64
    %v1449 = vld [vmem:[%s1448] sm:$0xf]
    %v1450 = vld [vmem:[%s1448 + $0x4] sm:$0xf]
    %v1451 = vld [vmem:[%s1448 + $0x8] sm:$0xf]
    %v1452 = vld [vmem:[%s1448 + $0xc] sm:$0xf]
    %v1453 = vld [vmem:[%s1448 + $0x10] sm:$0xf]
    %v1454 = vld [vmem:[%s1448 + $0x14] sm:$0xf]
    %v1455 = vld [vmem:[%s1448 + $0x18] sm:$0xf]
    %v1456 = vld [vmem:[%s1448 + $0x1c] sm:$0xf]
    %v1457 = vld [vmem:[%s1448 + $0x20] sm:$0xf]
    %v1458 = vld [vmem:[%s1448 + $0x24] sm:$0xf]
    %v1459 = vld [vmem:[%s1448 + $0x28] sm:$0xf]
    %v1460 = vld [vmem:[%s1448 + $0x2c] sm:$0xf]
    %v1461 = vld [vmem:[%s1448 + $0x30] sm:$0xf]
    %v1462 = vld [vmem:[%s1448 + $0x34] sm:$0xf]
    %v1463 = vld [vmem:[%s1448 + $0x38] sm:$0xf]
    %v1464 = vld [vmem:[%s1448 + $0x3c] sm:$0xf]
    %v1466 = vrot.slane %v1244, 1
    %v1484 = vunpack.c.l.b16 %v1449
    %v1485 = vunpack.c.l.b16 %v1450
    %v1486 = vunpack.c.l.b16 %v1451
    %v1487 = vunpack.c.l.b16 %v1452
    %v1488 = vunpack.c.l.b16 %v1453
    %v1489 = vunpack.c.l.b16 %v1454
    %v1490 = vunpack.c.l.b16 %v1455
    %v1491 = vunpack.c.l.b16 %v1456
    %v1492 = vunpack.c.l.b16 %v1457
    %v1493 = vunpack.c.l.b16 %v1458
    %v1494 = vunpack.c.l.b16 %v1459
    %v1495 = vunpack.c.l.b16 %v1460
    %v1496 = vunpack.c.l.b16 %v1461
    %v1497 = vunpack.c.l.b16 %v1462
    %v1498 = vunpack.c.l.b16 %v1463
    %v1499 = vunpack.c.l.b16 %v1464
    %v1500 = vpack.c.b16 %v1485, %v1484
    %v1501 = vpack.c.b16 %v1487, %v1486
    %v1502 = vpack.c.b16 %v1489, %v1488
    %v1503 = vpack.c.b16 %v1491, %v1490
    %v1504 = vpack.c.b16 %v1493, %v1492
    %v1505 = vpack.c.b16 %v1495, %v1494
    %v1506 = vpack.c.b16 %v1497, %v1496
    %v1507 = vpack.c.b16 %v1499, %v1498
    %1516 = vmatprep.subr.bf16.mxu0 0
    %1517 = vmatpush1.bf16.msra.mxu0 %v1500
    %1518 = vmatprep.subr.bf16.mxu0 0
    %1519 = vmatpush1.bf16.msra.mxu0 %v1501
    %1520 = vmatprep.subr.bf16.mxu0 0
    %1521 = vmatpush1.bf16.msra.mxu0 %v1502
    %1522 = vmatprep.subr.bf16.mxu0 0
    %1523 = vmatpush1.bf16.msra.mxu0 %v1503
    %1524 = vmatprep.subr.bf16.mxu0 0
    %1525 = vmatpush1.bf16.msra.mxu0 %v1504
    %1526 = vmatprep.subr.bf16.mxu0 0
    %1527 = vmatpush1.bf16.msra.mxu0 %v1505
    %1528 = vmatprep.subr.bf16.mxu0 0
    %1529 = vmatpush1.bf16.msra.mxu0 %v1506
    %1530 = vmatprep.subr.bf16.mxu0 0
    %1531 = vmatpush1.bf16.msra.mxu0 %v1507
    %1532 = vmatprep.subr.bf16.mxu0 0
    %1533 = vmatpush1.bf16.msra.mxu0 0
    %1534 = vmatprep.subr.bf16.mxu0 0
    %1535 = vmatpush1.bf16.msra.mxu0 0
    %1536 = vmatprep.subr.bf16.mxu0 0
    %1537 = vmatpush1.bf16.msra.mxu0 0
    %1538 = vmatprep.subr.bf16.mxu0 0
    %1539 = vmatpush1.bf16.msra.mxu0 0
    %1540 = vmatprep.subr.bf16.mxu0 0
    %1541 = vmatpush1.bf16.msra.mxu0 0
    %1542 = vmatprep.subr.bf16.mxu0 0
    %1543 = vmatpush1.bf16.msra.mxu0 0
    %1544 = vmatprep.subr.bf16.mxu0 0
    %1545 = vmatpush1.bf16.msra.mxu0 0
    %1546 = vmatprep.subr.bf16.mxu0 0
    %1547 = vmatpush1.bf16.msra.mxu0 0
    %1548 = vmatprep.mubr.bf16.mxu0 0
    %1549 = vmatmul.mubr.bf16.gmra.mrb[0].mxu0 %v1466
    %v1550 = vpop.f32.mrb[0].mxu0
    %v1551 = vadd.f32 0.0, %v1550
    %v1552 = vpop.f32.mrb[0].mxu0
    %v1553 = vpop.f32.mrb[0].mxu0
    %v1554 = vpop.f32.mrb[0].mxu0
    %1555 = vdwg.mxu0
    %v1572 = vunpack.c.l.b16 %v1432
    %v1573 = vunpack.c.l.b16 %v1433
    %v1574 = vunpack.c.l.b16 %v1434
    %v1575 = vunpack.c.l.b16 %v1435
    %v1576 = vunpack.c.l.b16 %v1436
    %v1577 = vunpack.c.l.b16 %v1437
    %v1578 = vunpack.c.l.b16 %v1438
    %v1579 = vunpack.c.l.b16 %v1439
    %v1580 = vunpack.c.l.b16 %v1440
    %v1581 = vunpack.c.l.b16 %v1441
    %v1582 = vunpack.c.l.b16 %v1442
    %v1583 = vunpack.c.l.b16 %v1443
    %v1584 = vunpack.c.l.b16 %v1444
    %v1585 = vunpack.c.l.b16 %v1445
    %v1586 = vunpack.c.l.b16 %v1446
    %v1587 = vunpack.c.l.b16 %v1447
    %v1588 = vpack.c.b16 %v1573, %v1572
    %v1589 = vpack.c.b16 %v1575, %v1574
    %v1590 = vpack.c.b16 %v1577, %v1576
    %v1591 = vpack.c.b16 %v1579, %v1578
    %v1592 = vpack.c.b16 %v1581, %v1580
    %v1593 = vpack.c.b16 %v1583, %v1582
    %v1594 = vpack.c.b16 %v1585, %v1584
    %v1595 = vpack.c.b16 %v1587, %v1586
    %1604 = vmatprep.subr.bf16.mxu0 0
    %1605 = vmatpush1.bf16.msra.mxu0 %v1588
    %1606 = vmatprep.subr.bf16.mxu0 0
    %1607 = vmatpush1.bf16.msra.mxu0 %v1589
    %1608 = vmatprep.subr.bf16.mxu0 0
    %1609 = vmatpush1.bf16.msra.mxu0 %v1590
    %1610 = vmatprep.subr.bf16.mxu0 0
    %1611 = vmatpush1.bf16.msra.mxu0 %v1591
    %1612 = vmatprep.subr.bf16.mxu0 0
    %1613 = vmatpush1.bf16.msra.mxu0 %v1592
    %1614 = vmatprep.subr.bf16.mxu0 0
    %1615 = vmatpush1.bf16.msra.mxu0 %v1593
    %1616 = vmatprep.subr.bf16.mxu0 0
    %1617 = vmatpush1.bf16.msra.mxu0 %v1594
    %1618 = vmatprep.subr.bf16.mxu0 0
    %1619 = vmatpush1.bf16.msra.mxu0 %v1595
    %1620 = vmatprep.subr.bf16.mxu0 0
    %1621 = vmatpush1.bf16.msra.mxu0 0
    %1622 = vmatprep.subr.bf16.mxu0 0
    %1623 = vmatpush1.bf16.msra.mxu0 0
    %1624 = vmatprep.subr.bf16.mxu0 0
    %1625 = vmatpush1.bf16.msra.mxu0 0
    %1626 = vmatprep.subr.bf16.mxu0 0
    %1627 = vmatpush1.bf16.msra.mxu0 0
    %1628 = vmatprep.subr.bf16.mxu0 0
    %1629 = vmatpush1.bf16.msra.mxu0 0
    %1630 = vmatprep.subr.bf16.mxu0 0
    %1631 = vmatpush1.bf16.msra.mxu0 0
    %1632 = vmatprep.subr.bf16.mxu0 0
    %1633 = vmatpush1.bf16.msra.mxu0 0
    %1634 = vmatprep.subr.bf16.mxu0 0
    %1635 = vmatpush1.bf16.msra.mxu0 0
    %1636 = vmatprep.mubr.bf16.mxu0 0
    %1637 = vmatmul.mubr.bf16.gmra.mrb[0].mxu0 %v1244
    %v1638 = vpop.f32.mrb[0].mxu0
    %v1639 = vadd.f32 %v1551, %v1638
    %v1640 = vpop.f32.mrb[0].mxu0
    %v1641 = vpop.f32.mrb[0].mxu0
    %v1642 = vpop.f32.mrb[0].mxu0
    %1643 = vdwg.mxu0
    %s1644 = scalar_lea.vmem %s12, 128
    %v1645 = vld [vmem:[%s1644] sm:$0xf]
    %v1646 = vld [vmem:[%s1644 + $0x4] sm:$0xf]
    %v1647 = vld [vmem:[%s1644 + $0x8] sm:$0xf]
    %v1648 = vld [vmem:[%s1644 + $0xc] sm:$0xf]
    %v1649 = vld [vmem:[%s1644 + $0x10] sm:$0xf]
    %v1650 = vld [vmem:[%s1644 + $0x14] sm:$0xf]
    %v1651 = vld [vmem:[%s1644 + $0x18] sm:$0xf]
    %v1652 = vld [vmem:[%s1644 + $0x1c] sm:$0xf]
    %v1653 = vld [vmem:[%s1644 + $0x20] sm:$0xf]
    %v1654 = vld [vmem:[%s1644 + $0x24] sm:$0xf]
    %v1655 = vld [vmem:[%s1644 + $0x28] sm:$0xf]
    %v1656 = vld [vmem:[%s1644 + $0x2c] sm:$0xf]
    %v1657 = vld [vmem:[%s1644 + $0x30] sm:$0xf]
    %v1658 = vld [vmem:[%s1644 + $0x34] sm:$0xf]
    %v1659 = vld [vmem:[%s1644 + $0x38] sm:$0xf]
    %v1660 = vld [vmem:[%s1644 + $0x3c] sm:$0xf]
    %v1677 = vunpack.c.l.b16 %v1645
    %v1678 = vunpack.c.l.b16 %v1646
    %v1679 = vunpack.c.l.b16 %v1647
    %v1680 = vunpack.c.l.b16 %v1648
    %v1681 = vunpack.c.l.b16 %v1649
    %v1682 = vunpack.c.l.b16 %v1650
    %v1683 = vunpack.c.l.b16 %v1651
    %v1684 = vunpack.c.l.b16 %v1652
    %v1685 = vunpack.c.l.b16 %v1653
    %v1686 = vunpack.c.l.b16 %v1654
    %v1687 = vunpack.c.l.b16 %v1655
    %v1688 = vunpack.c.l.b16 %v1656
    %v1689 = vunpack.c.l.b16 %v1657
    %v1690 = vunpack.c.l.b16 %v1658
    %v1691 = vunpack.c.l.b16 %v1659
    %v1692 = vunpack.c.l.b16 %v1660
    %v1693 = vpack.c.b16 %v1678, %v1677
    %v1694 = vpack.c.b16 %v1680, %v1679
    %v1695 = vpack.c.b16 %v1682, %v1681
    %v1696 = vpack.c.b16 %v1684, %v1683
    %v1697 = vpack.c.b16 %v1686, %v1685
    %v1698 = vpack.c.b16 %v1688, %v1687
    %v1699 = vpack.c.b16 %v1690, %v1689
    %v1700 = vpack.c.b16 %v1692, %v1691
    %1709 = vmatprep.subr.bf16.mxu0 0
    %1710 = vmatpush1.bf16.msra.mxu0 %v1693
    %1711 = vmatprep.subr.bf16.mxu0 0
    %1712 = vmatpush1.bf16.msra.mxu0 %v1694
    %1713 = vmatprep.subr.bf16.mxu0 0
    %1714 = vmatpush1.bf16.msra.mxu0 %v1695
    %1715 = vmatprep.subr.bf16.mxu0 0
    %1716 = vmatpush1.bf16.msra.mxu0 %v1696
    %1717 = vmatprep.subr.bf16.mxu0 0
    %1718 = vmatpush1.bf16.msra.mxu0 %v1697
    %1719 = vmatprep.subr.bf16.mxu0 0
    %1720 = vmatpush1.bf16.msra.mxu0 %v1698
    %1721 = vmatprep.subr.bf16.mxu0 0
    %1722 = vmatpush1.bf16.msra.mxu0 %v1699
    %1723 = vmatprep.subr.bf16.mxu0 0
    %1724 = vmatpush1.bf16.msra.mxu0 %v1700
    %1725 = vmatprep.subr.bf16.mxu0 0
    %1726 = vmatpush1.bf16.msra.mxu0 0
    %1727 = vmatprep.subr.bf16.mxu0 0
    %1728 = vmatpush1.bf16.msra.mxu0 0
    %1729 = vmatprep.subr.bf16.mxu0 0
    %1730 = vmatpush1.bf16.msra.mxu0 0
    %1731 = vmatprep.subr.bf16.mxu0 0
    %1732 = vmatpush1.bf16.msra.mxu0 0
    %1733 = vmatprep.subr.bf16.mxu0 0
    %1734 = vmatpush1.bf16.msra.mxu0 0
    %1735 = vmatprep.subr.bf16.mxu0 0
    %1736 = vmatpush1.bf16.msra.mxu0 0
    %1737 = vmatprep.subr.bf16.mxu0 0
    %1738 = vmatpush1.bf16.msra.mxu0 0
    %1739 = vmatprep.subr.bf16.mxu0 0
    %1740 = vmatpush1.bf16.msra.mxu0 0
    %1741 = vmatprep.mubr.bf16.mxu0 0
    %1742 = vmatmul.mubr.bf16.gmra.mrb[0].mxu0 %v1431
    %v1743 = vpop.f32.mrb[0].mxu0
    %v1744 = vadd.f32 0.0, %v1743
    %v1745 = vpop.f32.mrb[0].mxu0
    %v1746 = vpop.f32.mrb[0].mxu0
    %v1747 = vpop.f32.mrb[0].mxu0
    %1748 = vdwg.mxu0
    %v1749 = vadd.f32 %v1639, %v1744
    %s1750 = scalar_lea.vmem %s14, 3
    %v1751 = vld [vmem:[%s1750] sm:$0x1]
    %v1753 = vlaneseq
    %v1754 = vshrl.u32 %v1753, 7
    %v1755 = vsub.s32 0, %v1754
    %v1756 = vrot.slane %v1751, %v1755
    %v1758 = vadd.f32 %v1749, %v1756
    %v1759 = vmax.f32 %v1758, 0.0
    %v1760 = vpack.c.bf16 %v1759, %v1759
    %v1761 = vld [vmem:[%s13] sm:$0xf]
    %v1762 = vld [vmem:[%s13 + $0x4] sm:$0xf]
    %v1763 = vld [vmem:[%s13 + $0x8] sm:$0xf]
    %v1764 = vld [vmem:[%s13 + $0xc] sm:$0xf]
    %v1765 = vld [vmem:[%s13 + $0x10] sm:$0xf]
    %v1766 = vld [vmem:[%s13 + $0x14] sm:$0xf]
    %v1767 = vld [vmem:[%s13 + $0x18] sm:$0xf]
    %v1768 = vld [vmem:[%s13 + $0x1c] sm:$0xf]
    %v1769 = vld [vmem:[%s13 + $0x20] sm:$0xf]
    %v1770 = vld [vmem:[%s13 + $0x24] sm:$0xf]
    %v1771 = vld [vmem:[%s13 + $0x28] sm:$0xf]
    %v1772 = vld [vmem:[%s13 + $0x2c] sm:$0xf]
    %v1773 = vld [vmem:[%s13 + $0x30] sm:$0xf]
    %v1774 = vld [vmem:[%s13 + $0x34] sm:$0xf]
    %v1775 = vld [vmem:[%s13 + $0x38] sm:$0xf]
    %v1776 = vld [vmem:[%s13 + $0x3c] sm:$0xf]
    %s1777 = scalar_lea.vmem %s14, 4
    %v1778 = vld [vmem:[%s1777] sm:$0x1]
    %v1780 = vlaneseq
    %v1781 = vshrl.u32 %v1780, 7
    %v1782 = vsub.s32 0, %v1781
    %v1783 = vrot.slane %v1778, %v1782
    %v1801 = vunpack.c.l.b16 %v1761
    %v1802 = vunpack.c.l.b16 %v1762
    %v1803 = vunpack.c.l.b16 %v1763
    %v1804 = vunpack.c.l.b16 %v1764
    %v1805 = vunpack.c.l.b16 %v1765
    %v1806 = vunpack.c.l.b16 %v1766
    %v1807 = vunpack.c.l.b16 %v1767
    %v1808 = vunpack.c.l.b16 %v1768
    %v1809 = vunpack.c.l.b16 %v1769
    %v1810 = vunpack.c.l.b16 %v1770
    %v1811 = vunpack.c.l.b16 %v1771
    %v1812 = vunpack.c.l.b16 %v1772
    %v1813 = vunpack.c.l.b16 %v1773
    %v1814 = vunpack.c.l.b16 %v1774
    %v1815 = vunpack.c.l.b16 %v1775
    %v1816 = vunpack.c.l.b16 %v1776
    %v1817 = vpack.c.b16 %v1802, %v1801
    %v1818 = vpack.c.b16 %v1804, %v1803
    %v1819 = vpack.c.b16 %v1806, %v1805
    %v1820 = vpack.c.b16 %v1808, %v1807
    %v1821 = vpack.c.b16 %v1810, %v1809
    %v1822 = vpack.c.b16 %v1812, %v1811
    %v1823 = vpack.c.b16 %v1814, %v1813
    %v1824 = vpack.c.b16 %v1816, %v1815
    %1833 = vmatprep.subr.bf16.mxu0 0
    %1834 = vmatpush1.bf16.msra.mxu0 %v1817
    %1835 = vmatprep.subr.bf16.mxu0 0
    %1836 = vmatpush1.bf16.msra.mxu0 %v1818
    %1837 = vmatprep.subr.bf16.mxu0 0
    %1838 = vmatpush1.bf16.msra.mxu0 %v1819
    %1839 = vmatprep.subr.bf16.mxu0 0
    %1840 = vmatpush1.bf16.msra.mxu0 %v1820
    %1841 = vmatprep.subr.bf16.mxu0 0
    %1842 = vmatpush1.bf16.msra.mxu0 %v1821
    %1843 = vmatprep.subr.bf16.mxu0 0
    %1844 = vmatpush1.bf16.msra.mxu0 %v1822
    %1845 = vmatprep.subr.bf16.mxu0 0
    %1846 = vmatpush1.bf16.msra.mxu0 %v1823
    %1847 = vmatprep.subr.bf16.mxu0 0
    %1848 = vmatpush1.bf16.msra.mxu0 %v1824
    %1849 = vmatprep.subr.bf16.mxu0 0
    %1850 = vmatpush1.bf16.msra.mxu0 0
    %1851 = vmatprep.subr.bf16.mxu0 0
    %1852 = vmatpush1.bf16.msra.mxu0 0
    %1853 = vmatprep.subr.bf16.mxu0 0
    %1854 = vmatpush1.bf16.msra.mxu0 0
    %1855 = vmatprep.subr.bf16.mxu0 0
    %1856 = vmatpush1.bf16.msra.mxu0 0
    %1857 = vmatprep.subr.bf16.mxu0 0
    %1858 = vmatpush1.bf16.msra.mxu0 0
    %1859 = vmatprep.subr.bf16.mxu0 0
    %1860 = vmatpush1.bf16.msra.mxu0 0
    %1861 = vmatprep.subr.bf16.mxu0 0
    %1862 = vmatpush1.bf16.msra.mxu0 0
    %1863 = vmatprep.subr.bf16.mxu0 0
    %1864 = vmatpush1.bf16.msra.mxu0 0
    %1865 = vmatprep.mubr.bf16.mxu0 0
    %1866 = vmatmul.mubr.bf16.gmra.mrb[0].mxu0 %v1760
    %v1867 = vpop.f32.mrb[0].mxu0
    %v1868 = vadd.f32 %v1783, %v1867
    %v1869 = vpop.f32.mrb[0].mxu0
    %v1870 = vpop.f32.mrb[0].mxu0
    %v1871 = vpop.f32.mrb[0].mxu0
    %1872 = vdwg.mxu0
    %v1873 = vld [vmem:[%s15] sm:$0x3]
    %v1874 = vsub.f32 %v1868, %v1873
    %v1875 = vmul.f32 %v1874, %v1874
    %vm1876 = vcmask 41984
    %v1877 = vsel %vm1876, %v1875, 0.0
    %1878 = vadd.xlane.f32.xlu0 %v1877
    %v1879 = vpop.xlane.xlu0 %1878
    %v1880 = vrot.slane %v1879, 4
    %v1881 = vadd.f32 %v1879, %v1880
    %v1882 = vrot.slane %v1881, 2
    %v1883 = vadd.f32 %v1881, %v1882
    %v1884 = vrot.slane %v1883, 1
    %v1885 = vadd.f32 %v1883, %v1884
    %s1886 = vtos %v1885
    %s1887 = smul.f32 %s1886, 0.083333336
    %s1888 = scalar_lea.smem [#allocation2], 0
    %1889 = sst [smem:[%s1888]] %s1887
    // Predicated region
    $region66: #{abil_dt_forward.1} parent=1 // pred_check
      _
    $region67: #{abil_dt_forward.1} parent=1 // pred_check_branch
      %1891 = sbr.rel (0) target = $region69
    $region68: #{abil_dt_forward.1} parent=1 // pred_region
      %s1893 = ssub.s32 16, 16
      %1894 = vsyncadd [#allocation3], %s1893
      %1897 = dma.smem_to_hbm [#allocation2], 16, %s16, [#allocation3]
    $region69: #{abil_dt_forward.1} parent=1 // pred_fallthru
      _
    // Predicated region
    $region70: #{abil_dt_forward.1} parent=1 // pred_check
      _
    $region71: #{abil_dt_forward.1} parent=1 // pred_check_branch
      %1899 = sbr.rel (0) target = $region73
    $region72: #{abil_dt_forward.1} parent=1 // pred_region
      %1900 = dma.done [#allocation3], 16
    $region73: #{abil_dt_forward.1} parent=1 // pred_fallthru
      _
    %1901 = sfence
    %1902 = vsyncpa [#allocation3], 1

</llo_original>
